<compile_context>
chip_gen: v6e
topology: v6e:2x2x1
jax: 0.10.0
libtpu: 0.0.40
codegen_flags: <defaults>
</compile_context>

<pallas_src>
import functools

import numpy as np
import jax
import jax.numpy as jnp
from jax import lax
from jax.experimental import pallas as pl
from jax.experimental.pallas import tpu as pltpu

# ---------------- config (mtgnnConfig equivalent) ----------------
NUM_CLASSES = 3      # config.num_classes
LAYER_NUM   = 2      # config.layer_num
N_HEADS     = 2      # config.n_heads
HIDDEN      = 8      # config.hidden
FEAT_DIM    = 8      # config.feat_dim
FEAT_WEIGHT = 0.5    # config.feat_weight
DR          = 0.1    # config.dr (dropout prob; identity in eval mode)
H_TOT       = HIDDEN * N_HEADS        # per-class track width (16)
CH_TOT      = NUM_CLASSES * H_TOT     # class-stacked track width (48)


# ---------------- single fused, row-tiled kernel ------------------------------
def _fused_kernel(adj_ref, track_ref, x_ref, attn_ref, w_in_ref, b_in_ref,
                  w_ex_ref, b_ex_ref, o_ref,
                  t_buf, ts_buf, initw_buf, dinv_buf,
                  *, feat_weight, num_classes, n_heads, hidden):
    s = pl.program_id(0)                 # 0: norm/init pass, 1..2L: propagation passes
    i = pl.program_id(1)                 # node row-tile index
    tm = adj_ref.shape[0]                # rows per tile (static)
    h_tot = hidden * n_heads
    fw = feat_weight
    row0 = pl.multiple_of(i * tm, tm)
    rows = pl.ds(row0, tm)

    # ---- pass 0: gcn_norm degrees (add_self_loops) + input_layer + seed T ----
    @pl.when(s == 0)
    def _():
        # fill_diag(A, 1) degrees; assumes zero-diagonal adjacency so
        # fill_diag(A, 1) == A + I  =>  deg = rowsum(A) + 1.
        # TODO(synk): nonzero-diagonal adjacencies would need the diagonal
        # subtracted here (requires an iota mask we deliberately avoid).
        a_rows = adj_ref[...].astype(jnp.float32)                   # (tm, n)
        deg = jnp.sum(a_rows, axis=1, keepdims=True) + 1.0
        dinv_buf[rows, :] = jnp.where(deg > 0.0, lax.rsqrt(deg), 0.0)

        # input_layer: Dropout(eval = identity) -> Linear -> ReLU
        # TODO(synk): training-mode stochastic dropout not implemented.
        init_x = jnp.maximum(
            jnp.dot(x_ref[...], w_in_ref[...],
                    preferred_element_type=jnp.float32) + b_in_ref[...], 0.0)
        # repeat 'n h -> n (c h)' (class-major) and pre-scale by (1 - fw)
        initw_buf[rows, :] = (1.0 - fw) * jnp.concatenate(
            [init_x] * num_classes, axis=1)

        # seed the class-stacked track state ('c n h -> n (c h)' done in wrapper)
        t_buf[rows, :] = track_ref[...].astype(jnp.float32)

    # ---- passes 1..2L: one A_hat @ T propagation per pass --------------------
    @pl.when(s > 0)
    def _():
        # Once per pass: fold the D^{-1/2} *column* scaling into the small
        # (N, 48) T instead of the big adjacency block, and cast to bf16 so the
        # streamed matmul runs with native bf16 MXU operands (f32 accumulate).
        @pl.when(i == 0)
        def _():
            ts_buf[...] = (dinv_buf[...] * t_buf[...]).astype(jnp.bfloat16)

        d_rows = dinv_buf[rows, :]                                   # (tm, 1)
        # rows of A_hat @ T = d_rows * ( A[rows,:] @ (dinv*T) + (dinv*T)[rows] )
        prop = jnp.dot(adj_ref[...], ts_buf[...],
                       preferred_element_type=jnp.float32)           # (tm, 48)
        prop = d_rows * (prop + ts_buf[rows, :].astype(jnp.float32))

        @pl.when(s % 2 == 1)        # first propagation of a conv layer
        def _():
            t_buf[rows, :] = prop

        @pl.when(s % 2 == 0)        # second propagation: mix with (1-fw)*init_x
        def _():
            t_buf[rows, :] = fw * prop + initw_buf[rows, :]

    # ---- epilogue: attention-weighted class sum + extra_embeding head --------
    # Cheap and branch-free; executed every pass, only the final pass's value
    # survives in HBM (same output rows are rewritten each pass).
    t_cur = t_buf[rows, :]
    emb = jnp.zeros((tm, h_tot), jnp.float32)
    for c in range(num_classes):
        emb = emb + attn_ref[:, c:c + 1] * t_cur[:, c * h_tot:(c + 1) * h_tot]
    # 'b (e h) -> b h e' + Linear(n_heads, 1): head-major blocks of size `hidden`
    out = jnp.zeros((tm, hidden), jnp.float32) + b_ex_ref[0]
    for e in range(n_heads):
        out = out + w_ex_ref[e] * emb[:, e * hidden:(e + 1) * hidden]
    o_ref[...] = out


# ---------------- wrapper ------------------------------------------------------
def _pick_row_tile(n, cap=512):
    tm = 8
    for cand in range(8, min(n, cap) + 1, 8):
        if n % cand == 0:
            tm = cand
    return tm


def base_track_processer_forward(params, track_h, attn, adj, x,
                                 is_training=False, row_tile=None):
    if is_training:
        # TODO(synk): training-mode dropout (stochastic) not implemented.
        raise NotImplementedError("only eval mode (dropout = identity) is supported")

    c, n, h_tot = track_h.shape
    f = x.shape[1]
    ch = c * h_tot
    assert c == NUM_CLASSES and h_tot == H_TOT
    assert n % 8 == 0, "node count must be a multiple of 8 for this kernel"

    tm = row_tile if row_tile is not None else _pick_row_tile(n)
    assert n % tm == 0 and tm % 8 == 0
    n_prop = 2 * LAYER_NUM
    grid = (n_prop + 1, n // tm)      # (norm/init pass + 2 propagations/layer, row tiles)

    # 'c n h -> n (c h)' class-major stacking: one 48-wide propagation replaces
    # three 16-wide ones (better MXU column / vreg lane utilization).
    track_stacked = jnp.transpose(track_h, (1, 0, 2)).reshape(n, ch)
    # 0/1 adjacency is exact in bf16: halves the dominant HBM stream.
    adj_bf16 = adj.astype(jnp.bfloat16)

    kernel = functools.partial(
        _fused_kernel, feat_weight=FEAT_WEIGHT, num_classes=c,
        n_heads=N_HEADS, hidden=HIDDEN)

    flops = int(2 * n * n * ch * n_prop + 2 * n * f * h_tot + n * n)
    bytes_accessed = int((n_prop + 1) * n * n * 2 + n * (ch + f + c + HIDDEN) * 4)
    cost = pl.CostEstimate(flops=flops, transcendentals=int(n),
                           bytes_accessed=bytes_accessed)

    return pl.pallas_call(
        kernel,
        out_shape=jax.ShapeDtypeStruct((n, HIDDEN), jnp.float32),
        grid=grid,
        in_specs=[
            pl.BlockSpec((tm, n), lambda s, i: (i, 0)),          # adj rows (bf16), streamed/double-buffered
            pl.BlockSpec((tm, ch), lambda s, i: (i, 0)),         # stacked track_h rows
            pl.BlockSpec((tm, f), lambda s, i: (i, 0)),          # x rows
            pl.BlockSpec((tm, c), lambda s, i: (i, 0)),          # attn rows
            pl.BlockSpec((f, h_tot), lambda s, i: (0, 0)),       # w_in (resident)
            pl.BlockSpec((1, h_tot), lambda s, i: (0, 0)),       # b_in (resident)
            pl.BlockSpec(memory_space=pltpu.MemorySpace.SMEM),   # w_ex (scalars)
            pl.BlockSpec(memory_space=pltpu.MemorySpace.SMEM),   # b_ex (scalar)
        ],
        out_specs=pl.BlockSpec((tm, HIDDEN), lambda s, i: (i, 0)),
        scratch_shapes=[
            pltpu.VMEM((n, ch), jnp.float32),     # t_buf   : track state T
            pltpu.VMEM((n, ch), jnp.bfloat16),    # ts_buf  : per-pass bf16 snapshot of D^{-1/2} T
            pltpu.VMEM((n, ch), jnp.float32),     # initw_buf: (1-fw) * repeated init_x
            pltpu.VMEM((n, 1), jnp.float32),      # dinv_buf: D^{-1/2}
        ],
        compiler_params=pltpu.CompilerParams(
            # Row tiles of a pass share the VMEM-resident T -> sequential grid.
            dimension_semantics=("arbitrary", "arbitrary"),
            vmem_limit_bytes=32 * 1024 * 1024),
        cost_estimate=cost,
    )(adj_bf16, track_stacked, x, attn,
      params["w_in"], params["b_in"].reshape(1, h_tot),
      params["w_ex"], params["b_ex"])


# ---------------- pure-JAX reference (for tolerance check) --------------------
def _reference_forward(params, track_h, attn, adj, x):
    c, n, h_tot = track_h.shape
    a = adj + jnp.eye(n, dtype=adj.dtype)             # fill_diag on zero-diag adj
    deg = a.sum(axis=1)
    dinv = jnp.where(deg > 0, 1.0 / jnp.sqrt(deg), 0.0)
    a_hat = dinv[:, None] * a * dinv[None, :]
    init_x = jax.nn.relu(x @ params["w_in"] + params["b_in"])
    init_rep = jnp.tile(init_x, (1, c))
    t = jnp.transpose(track_h, (1, 0, 2)).reshape(n, c * h_tot)
    for _ in range(LAYER_NUM):
        p = a_hat @ t
        t = FEAT_WEIGHT * (a_hat @ p) + (1.0 - FEAT_WEIGHT) * init_rep
    tracks = t.reshape(n, c, h_tot)
    emb = jnp.sum(attn[:, :, None] * tracks, axis=1)
    embr = emb.reshape(n, N_HEADS, HIDDEN)            # 'b (e h) -> b e h'
    return jnp.einsum('neh,e->nh', embr, params["w_ex"]) + params["b_ex"][0]


if __name__ == "__main__":
    key = jax.random.PRNGKey(0)
    k1, k2, k3, k4, k5, k6 = jax.random.split(key, 6)

    N = 256  # number of nodes (small demo; row_tile=128 exercises the tiled path)

    x = jax.random.normal(k1, (N, FEAT_DIM), jnp.float32)
    track_h = jax.random.normal(k2, (NUM_CLASSES, N, H_TOT), jnp.float32)
    attn = jax.nn.softmax(jax.random.normal(k3, (N, NUM_CLASSES), jnp.float32), axis=-1)

    # random symmetric 0/1 adjacency with zero diagonal
    a_rand = (jax.random.uniform(k4, (N, N)) < 0.1).astype(jnp.float32)
    adj = jnp.maximum(a_rand, a_rand.T) * (1.0 - jnp.eye(N, dtype=jnp.float32))

    params = {
        "w_in": 0.1 * jax.random.normal(k5, (FEAT_DIM, H_TOT), jnp.float32),
        "b_in": 0.01 * jnp.arange(H_TOT, dtype=jnp.float32),
        "w_ex": 0.1 * jax.random.normal(k6, (N_HEADS,), jnp.float32),
        "b_ex": 0.01 * jnp.ones((1,), jnp.float32),
    }

    out = base_track_processer_forward(params, track_h, attn, adj, x,
                                       is_training=False, row_tile=128)
    out = jax.block_until_ready(out)
    assert out.shape == (N, HIDDEN) and out.dtype == jnp.float32

    ref = _reference_forward(params, track_h, attn, adj, x)
    np.testing.assert_allclose(np.asarray(out), np.asarray(ref), rtol=5e-2, atol=5e-2)
    print("KERNEL_OK")
</pallas_src>

<mosaic_0001>
module attributes {stable_mosaic.version = 11 : i64} {
  func.func @_fused_kernel(%arg0: i32, %arg1: i32, %arg2: memref<128x256xbf16, #tpu.memory_space<vmem>>, %arg3: memref<128x48xf32, #tpu.memory_space<vmem>>, %arg4: memref<128x8xf32, #tpu.memory_space<vmem>>, %arg5: memref<128x3xf32, #tpu.memory_space<vmem>>, %arg6: memref<8x16xf32, #tpu.memory_space<vmem>>, %arg7: memref<1x16xf32, #tpu.memory_space<vmem>>, %arg8: memref<2xf32, #tpu.memory_space<smem>>, %arg9: memref<1xf32, #tpu.memory_space<smem>>, %arg10: memref<128x8xf32, #tpu.memory_space<vmem>>, %arg11: memref<256x48xf32, #tpu.memory_space<vmem>>, %arg12: memref<256x48xbf16, #tpu.memory_space<vmem>>, %arg13: memref<256x48xf32, #tpu.memory_space<vmem>>, %arg14: memref<256x1xf32, #tpu.memory_space<vmem>>) attributes {dimension_semantics = [#tpu.dimension_semantics<arbitrary>, #tpu.dimension_semantics<arbitrary>], iteration_bounds = array<i64: 5, 2>, scalar_prefetch = 0 : i64, scratch_operands = 4 : i64, tpu.core_type = #tpu.core_type<tc>, window_params = [{transform_indices = @transform_0, window_bounds = array<i64: 128, 256>}, {transform_indices = @transform_1, window_bounds = array<i64: 128, 48>}, {transform_indices = @transform_2, window_bounds = array<i64: 128, 8>}, {transform_indices = @transform_3, window_bounds = array<i64: 128, 3>}, {pipeline_mode = #tpu.pipeline_mode<synchronous>, transform_indices = @transform_4, window_bounds = array<i64: 8, 16>}, {pipeline_mode = #tpu.pipeline_mode<synchronous>, transform_indices = @transform_5, window_bounds = array<i64: 1, 16>}, {transform_indices = @transform_6, window_bounds = array<i64: 2>}, {transform_indices = @transform_7, window_bounds = array<i64: 1>}, {transform_indices = @transform_8, window_bounds = array<i64: 128, 8>}]} {
    %c128_i32 = arith.constant 128 : i32
    %0 = arith.muli %arg1, %c128_i32 : i32
    %1 = tpu.assume_multiple %0, 128 : i32
    %c0_i32 = arith.constant 0 : i32
    %2 = arith.cmpi eq, %arg0, %c0_i32 : i32
    %3 = arith.extui %2 : i1 to i32
    %c0_i32_0 = arith.constant 0 : i32
    %4 = arith.cmpi ne, %3, %c0_i32_0 : i32
    scf.if %4 {
      %c0_13 = arith.constant 0 : index
      %c0_14 = arith.constant 0 : index
      %41 = vector.load %arg2[%c0_13, %c0_14] : memref<128x256xbf16, #tpu.memory_space<vmem>>, vector<128x256xbf16>
      %42 = arith.extf %41 : vector<128x256xbf16> to vector<128x256xf32>
      %cst_15 = arith.constant dense<0.000000e+00> : vector<128xf32>
      %43 = vector.multi_reduction <add>, %42, %cst_15 [1] : vector<128x256xf32> to vector<128xf32>
      %44 = vector.shape_cast %43 : vector<128xf32> to vector<128x1xf32>
      %cst_16 = arith.constant 1.000000e+00 : f32
      %45 = vector.broadcast %cst_16 : f32 to vector<128x1xf32>
      %46 = arith.addf %44, %45 : vector<128x1xf32>
      %cst_17 = arith.constant 0.000000e+00 : f32
      %47 = vector.broadcast %cst_17 : f32 to vector<128x1xf32>
      %48 = arith.cmpf ogt, %46, %47 : vector<128x1xf32>
      %49 = math.rsqrt %46 : vector<128x1xf32>
      %cst_18 = arith.constant 0.000000e+00 : f32
      %50 = vector.broadcast %cst_18 : f32 to vector<128x1xf32>
      %51 = arith.select %48, %49, %50 : vector<128x1xi1>, vector<128x1xf32>
      %52 = arith.index_cast %1 : i32 to index
      %c0_19 = arith.constant 0 : index
      %53 = vector.load %arg14[%52, %c0_19] : memref<256x1xf32, #tpu.memory_space<vmem>>, vector<128x1xf32>
      tpu.vector_store %arg14[%52, %c0_19], %51 {strides = array<i32>} : memref<256x1xf32, #tpu.memory_space<vmem>>, vector<128x1xf32>,
      %c0_20 = arith.constant 0 : index
      %c0_21 = arith.constant 0 : index
      %54 = vector.load %arg4[%c0_20, %c0_21] : memref<128x8xf32, #tpu.memory_space<vmem>>, vector<128x8xf32>
      %c0_22 = arith.constant 0 : index
      %c0_23 = arith.constant 0 : index
      %55 = vector.load %arg6[%c0_22, %c0_23] : memref<8x16xf32, #tpu.memory_space<vmem>>, vector<8x16xf32>
      %cst_24 = arith.constant dense<0.000000e+00> : vector<128x16xf32>
      %56 = tpu.matmul %54, %55, %cst_24 {dimension_numbers = #tpu.dot_dimension_numbers<[1], [0], [0], [1], [0, 0, 1, 1], [], []>} : vector<128x8xf32>, vector<8x16xf32>, vector<128x16xf32> -> vector<128x16xf32>
      %c0_25 = arith.constant 0 : index
      %c0_26 = arith.constant 0 : index
      %57 = vector.load %arg7[%c0_25, %c0_26] : memref<1x16xf32, #tpu.memory_space<vmem>>, vector<1x16xf32>
      %58 = vector.broadcast %57 : vector<1x16xf32> to vector<128x16xf32>
      %59 = arith.addf %56, %58 : vector<128x16xf32>
      %cst_27 = arith.constant 0.000000e+00 : f32
      %60 = vector.broadcast %cst_27 : f32 to vector<128x16xf32>
      %61 = arith.maximumf %59, %60 : vector<128x16xf32>
      %62 = tpu.concatenate %61, %61, %61 in 1 : vector<128x16xf32>, vector<128x16xf32>, vector<128x16xf32> -> vector<128x48xf32>
      %cst_28 = arith.constant 5.000000e-01 : f32
      %63 = vector.broadcast %cst_28 : f32 to vector<128x48xf32>
      %64 = arith.mulf %63, %62 : vector<128x48xf32>
      %65 = arith.index_cast %1 : i32 to index
      %c0_29 = arith.constant 0 : index
      %66 = vector.load %arg13[%65, %c0_29] : memref<256x48xf32, #tpu.memory_space<vmem>>, vector<128x48xf32>
      tpu.vector_store %arg13[%65, %c0_29], %64 {strides = array<i32>} : memref<256x48xf32, #tpu.memory_space<vmem>>, vector<128x48xf32>,
      %c0_30 = arith.constant 0 : index
      %c0_31 = arith.constant 0 : index
      %67 = vector.load %arg3[%c0_30, %c0_31] : memref<128x48xf32, #tpu.memory_space<vmem>>, vector<128x48xf32>
      %68 = arith.index_cast %1 : i32 to index
      %c0_32 = arith.constant 0 : index
      %69 = vector.load %arg11[%68, %c0_32] : memref<256x48xf32, #tpu.memory_space<vmem>>, vector<128x48xf32>
      tpu.vector_store %arg11[%68, %c0_32], %67 {strides = array<i32>} : memref<256x48xf32, #tpu.memory_space<vmem>>, vector<128x48xf32>,
    } else {
    }
    %c0_i32_1 = arith.constant 0 : i32
    %5 = arith.cmpi sgt, %arg0, %c0_i32_1 : i32
    %6 = arith.extui %5 : i1 to i32
    %c0_i32_2 = arith.constant 0 : i32
    %7 = arith.cmpi ne, %6, %c0_i32_2 : i32
    scf.if %7 {
      %c0_i32_13 = arith.constant 0 : i32
      %41 = arith.cmpi eq, %arg1, %c0_i32_13 : i32
      %42 = arith.extui %41 : i1 to i32
      %c0_i32_14 = arith.constant 0 : i32
      %43 = arith.cmpi ne, %42, %c0_i32_14 : i32
      scf.if %43 {
        %c0_36 = arith.constant 0 : index
        %c0_37 = arith.constant 0 : index
        %81 = vector.load %arg14[%c0_36, %c0_37] : memref<256x1xf32, #tpu.memory_space<vmem>>, vector<256x1xf32>
        %c0_38 = arith.constant 0 : index
        %c0_39 = arith.constant 0 : index
        %82 = vector.load %arg11[%c0_38, %c0_39] : memref<256x48xf32, #tpu.memory_space<vmem>>, vector<256x48xf32>
        %83 = vector.broadcast %81 : vector<256x1xf32> to vector<256x48xf32>
        %84 = arith.mulf %83, %82 : vector<256x48xf32>
        %85 = arith.truncf %84 : vector<256x48xf32> to vector<256x48xbf16>
        %c0_40 = arith.constant 0 : index
        %c0_41 = arith.constant 0 : index
        %86 = vector.load %arg12[%c0_40, %c0_41] : memref<256x48xbf16, #tpu.memory_space<vmem>>, vector<256x48xbf16>
        tpu.vector_store %arg12[%c0_40, %c0_41], %85 {strides = array<i32>} : memref<256x48xbf16, #tpu.memory_space<vmem>>, vector<256x48xbf16>,
      } else {
      }
      %44 = arith.index_cast %1 : i32 to index
      %c0_15 = arith.constant 0 : index
      %45 = vector.load %arg14[%44, %c0_15] : memref<256x1xf32, #tpu.memory_space<vmem>>, vector<128x1xf32>
      %c0_16 = arith.constant 0 : index
      %c0_17 = arith.constant 0 : index
      %46 = vector.load %arg2[%c0_16, %c0_17] : memref<128x256xbf16, #tpu.memory_space<vmem>>, vector<128x256xbf16>
      %c0_18 = arith.constant 0 : index
      %c0_19 = arith.constant 0 : index
      %47 = vector.load %arg12[%c0_18, %c0_19] : memref<256x48xbf16, #tpu.memory_space<vmem>>, vector<256x48xbf16>
      %cst_20 = arith.constant dense<0.000000e+00> : vector<128x48xf32>
      %48 = tpu.matmul %46, %47, %cst_20 {dimension_numbers = #tpu.dot_dimension_numbers<[1], [0], [0], [1], [0, 0, 1, 1], [], []>} : vector<128x256xbf16>, vector<256x48xbf16>, vector<128x48xf32> -> vector<128x48xf32>
      %49 = arith.index_cast %1 : i32 to index
      %c0_21 = arith.constant 0 : index
      %50 = vector.load %arg12[%49, %c0_21] : memref<256x48xbf16, #tpu.memory_space<vmem>>, vector<128x48xbf16>
      %51 = arith.extf %50 : vector<128x48xbf16> to vector<128x48xf32>
      %52 = arith.addf %48, %51 : vector<128x48xf32>
      %53 = vector.broadcast %45 : vector<128x1xf32> to vector<128x48xf32>
      %54 = arith.mulf %53, %52 : vector<128x48xf32>
      %c2_i32 = arith.constant 2 : i32
      %c0_i32_22 = arith.constant 0 : i32
      %55 = arith.cmpi eq, %c2_i32, %c0_i32_22 : i32
      %c1_i32 = arith.constant 1 : i32
      %56 = arith.select %55, %c1_i32, %c2_i32 : i32
      %57 = arith.remsi %arg0, %56 : i32
      %c0_i32_23 = arith.constant 0 : i32
      %58 = arith.cmpi ne, %57, %c0_i32_23 : i32
      %c0_i32_24 = arith.constant 0 : i32
      %59 = arith.cmpi slt, %57, %c0_i32_24 : i32
      %c0_i32_25 = arith.constant 0 : i32
      %60 = arith.cmpi slt, %56, %c0_i32_25 : i32
      %61 = arith.xori %59, %60 : i1
      %62 = arith.andi %61, %58 : i1
      %63 = arith.addi %57, %56 : i32
      %64 = arith.select %62, %63, %57 : i32
      %c1_i32_26 = arith.constant 1 : i32
      %65 = arith.cmpi eq, %64, %c1_i32_26 : i32
      %66 = arith.extui %65 : i1 to i32
      %c0_i32_27 = arith.constant 0 : i32
      %67 = arith.cmpi ne, %66, %c0_i32_27 : i32
      scf.if %67 {
        %81 = arith.index_cast %1 : i32 to index
        %c0_36 = arith.constant 0 : index
        %82 = vector.load %arg11[%81, %c0_36] : memref<256x48xf32, #tpu.memory_space<vmem>>, vector<128x48xf32>
        tpu.vector_store %arg11[%81, %c0_36], %54 {strides = array<i32>} : memref<256x48xf32, #tpu.memory_space<vmem>>, vector<128x48xf32>,
      } else {
      }
      %c2_i32_28 = arith.constant 2 : i32
      %c0_i32_29 = arith.constant 0 : i32
      %68 = arith.cmpi eq, %c2_i32_28, %c0_i32_29 : i32
      %c1_i32_30 = arith.constant 1 : i32
      %69 = arith.select %68, %c1_i32_30, %c2_i32_28 : i32
      %70 = arith.remsi %arg0, %69 : i32
      %c0_i32_31 = arith.constant 0 : i32
      %71 = arith.cmpi ne, %70, %c0_i32_31 : i32
      %c0_i32_32 = arith.constant 0 : i32
      %72 = arith.cmpi slt, %70, %c0_i32_32 : i32
      %c0_i32_33 = arith.constant 0 : i32
      %73 = arith.cmpi slt, %69, %c0_i32_33 : i32
      %74 = arith.xori %72, %73 : i1
      %75 = arith.andi %74, %71 : i1
      %76 = arith.addi %70, %69 : i32
      %77 = arith.select %75, %76, %70 : i32
      %c0_i32_34 = arith.constant 0 : i32
      %78 = arith.cmpi eq, %77, %c0_i32_34 : i32
      %79 = arith.extui %78 : i1 to i32
      %c0_i32_35 = arith.constant 0 : i32
      %80 = arith.cmpi ne, %79, %c0_i32_35 : i32
      scf.if %80 {
        %cst_36 = arith.constant 5.000000e-01 : f32
        %81 = vector.broadcast %cst_36 : f32 to vector<128x48xf32>
        %82 = arith.mulf %81, %54 : vector<128x48xf32>
        %83 = arith.index_cast %1 : i32 to index
        %c0_37 = arith.constant 0 : index
        %84 = vector.load %arg13[%83, %c0_37] : memref<256x48xf32, #tpu.memory_space<vmem>>, vector<128x48xf32>
        %85 = arith.addf %82, %84 : vector<128x48xf32>
        %86 = arith.index_cast %1 : i32 to index
        %c0_38 = arith.constant 0 : index
        %87 = vector.load %arg11[%86, %c0_38] : memref<256x48xf32, #tpu.memory_space<vmem>>, vector<128x48xf32>
        tpu.vector_store %arg11[%86, %c0_38], %85 {strides = array<i32>} : memref<256x48xf32, #tpu.memory_space<vmem>>, vector<128x48xf32>,
      } else {
      }
    } else {
    }
    %8 = arith.index_cast %1 : i32 to index
    %c0 = arith.constant 0 : index
    %9 = vector.load %arg11[%8, %c0] : memref<256x48xf32, #tpu.memory_space<vmem>>, vector<128x48xf32>
    %cst = arith.constant 0.000000e+00 : f32
    %10 = vector.broadcast %cst : f32 to vector<128x16xf32>
    %c0_3 = arith.constant 0 : index
    %c0_4 = arith.constant 0 : index
    %11 = vector.load %arg5[%c0_3, %c0_4] : memref<128x3xf32, #tpu.memory_space<vmem>>, vector<128x1xf32>
    %12 = vector.extract_strided_slice %9 {offsets = [0, 0], sizes = [128, 16], strides = [1, 1]} : vector<128x48xf32> to vector<128x16xf32>
    %13 = vector.broadcast %11 : vector<128x1xf32> to vector<128x16xf32>
    %14 = arith.mulf %13, %12 : vector<128x16xf32>
    %15 = arith.addf %10, %14 : vector<128x16xf32>
    %c0_5 = arith.constant 0 : index
    %c1 = arith.constant 1 : index
    %16 = vector.load %arg5[%c0_5, %c1] : memref<128x3xf32, #tpu.memory_space<vmem>>, vector<128x1xf32>
    %17 = vector.extract_strided_slice %9 {offsets = [0, 16], sizes = [128, 16], strides = [1, 1]} : vector<128x48xf32> to vector<128x16xf32>
    %18 = vector.broadcast %16 : vector<128x1xf32> to vector<128x16xf32>
    %19 = arith.mulf %18, %17 : vector<128x16xf32>
    %20 = arith.addf %15, %19 : vector<128x16xf32>
    %c0_6 = arith.constant 0 : index
    %c2 = arith.constant 2 : index
    %21 = vector.load %arg5[%c0_6, %c2] : memref<128x3xf32, #tpu.memory_space<vmem>>, vector<128x1xf32>
    %22 = vector.extract_strided_slice %9 {offsets = [0, 32], sizes = [128, 16], strides = [1, 1]} : vector<128x48xf32> to vector<128x16xf32>
    %23 = vector.broadcast %21 : vector<128x1xf32> to vector<128x16xf32>
    %24 = arith.mulf %23, %22 : vector<128x16xf32>
    %25 = arith.addf %20, %24 : vector<128x16xf32>
    %cst_7 = arith.constant 0.000000e+00 : f32
    %26 = vector.broadcast %cst_7 : f32 to vector<128x8xf32>
    %c0_8 = arith.constant 0 : index
    %27 = memref.load %arg9[%c0_8] : memref<1xf32, #tpu.memory_space<smem>>
    %28 = vector.broadcast %27 : f32 to vector<128x8xf32>
    %29 = arith.addf %26, %28 : vector<128x8xf32>
    %c0_9 = arith.constant 0 : index
    %30 = memref.load %arg8[%c0_9] : memref<2xf32, #tpu.memory_space<smem>>
    %31 = vector.extract_strided_slice %25 {offsets = [0, 0], sizes = [128, 8], strides = [1, 1]} : vector<128x16xf32> to vector<128x8xf32>
    %32 = vector.broadcast %30 : f32 to vector<128x8xf32>
    %33 = arith.mulf %32, %31 : vector<128x8xf32>
    %34 = arith.addf %29, %33 : vector<128x8xf32>
    %c1_10 = arith.constant 1 : index
    %35 = memref.load %arg8[%c1_10] : memref<2xf32, #tpu.memory_space<smem>>
    %36 = vector.extract_strided_slice %25 {offsets = [0, 8], sizes = [128, 8], strides = [1, 1]} : vector<128x16xf32> to vector<128x8xf32>
    %37 = vector.broadcast %35 : f32 to vector<128x8xf32>
    %38 = arith.mulf %37, %36 : vector<128x8xf32>
    %39 = arith.addf %34, %38 : vector<128x8xf32>
    %c0_11 = arith.constant 0 : index
    %c0_12 = arith.constant 0 : index
    %40 = vector.load %arg10[%c0_11, %c0_12] : memref<128x8xf32, #tpu.memory_space<vmem>>, vector<128x8xf32>
    tpu.vector_store %arg10[%c0_11, %c0_12], %39 {strides = array<i32>} : memref<128x8xf32, #tpu.memory_space<vmem>>, vector<128x8xf32>,
    return
  }
  func.func @transform_0(%arg0: i32, %arg1: i32) -> (i32, i32) {
    %c0_i32 = arith.constant 0 : i32
    %c0_i32_0 = arith.constant 0 : i32
    return %arg1, %c0_i32 : i32, i32
  }
  func.func @transform_1(%arg0: i32, %arg1: i32) -> (i32, i32) {
    %c0_i32 = arith.constant 0 : i32
    %c0_i32_0 = arith.constant 0 : i32
    return %arg1, %c0_i32 : i32, i32
  }
  func.func @transform_2(%arg0: i32, %arg1: i32) -> (i32, i32) {
    %c0_i32 = arith.constant 0 : i32
    %c0_i32_0 = arith.constant 0 : i32
    return %arg1, %c0_i32 : i32, i32
  }
  func.func @transform_3(%arg0: i32, %arg1: i32) -> (i32, i32) {
    %c0_i32 = arith.constant 0 : i32
    %c0_i32_0 = arith.constant 0 : i32
    return %arg1, %c0_i32 : i32, i32
  }
  func.func @transform_4(%arg0: i32, %arg1: i32) -> (i32, i32) {
    %c0_i32 = arith.constant 0 : i32
    %c0_i32_0 = arith.constant 0 : i32
    %c0_i32_1 = arith.constant 0 : i32
    return %c0_i32, %c0_i32_0 : i32, i32
  }
  func.func @transform_5(%arg0: i32, %arg1: i32) -> (i32, i32) {
    %c0_i32 = arith.constant 0 : i32
    %c0_i32_0 = arith.constant 0 : i32
    %c0_i32_1 = arith.constant 0 : i32
    return %c0_i32, %c0_i32_0 : i32, i32
  }
  func.func @transform_6(%arg0: i32, %arg1: i32) -> i32 {
    %c0_i32 = arith.constant 0 : i32
    %c0_i32_0 = arith.constant 0 : i32
    return %c0_i32 : i32
  }
  func.func @transform_7(%arg0: i32, %arg1: i32) -> i32 {
    %c0_i32 = arith.constant 0 : i32
    %c0_i32_0 = arith.constant 0 : i32
    return %c0_i32 : i32
  }
  func.func @transform_8(%arg0: i32, %arg1: i32) -> (i32, i32) {
    %c0_i32 = arith.constant 0 : i32
    %c0_i32_0 = arith.constant 0 : i32
    return %arg1, %c0_i32 : i32, i32
  }
}

</mosaic_0001>

<llo_original>
// kernel: tpu_custom_call.1
$region0: #{tpu_custom_call.1}
  #allocation0 [shape = 'u32[]', space=smem, size = 0x4, offset = 0x4, fixed_abs, tag = 'smem constant byte address 0x4 - core index']
  #allocation1 [shape = 'u32[144,128]{1,0:T(1,128)}', space=vmem, size = 0x12000, scoped, tag = 'internal scratch']
  #allocation2 [shape = 'f32[256,48]{1,0:T(8,128)}', space=vmem, size = 0x20000, scoped, tag = 'scratch operand']
  #allocation3 [shape = 'bf16[256,48]{1,0:T(8,128)(2,1)}', space=vmem, size = 0x10000, scoped, tag = 'scratch operand']
  #allocation4 [shape = 'f32[256,48]{1,0:T(8,128)}', space=vmem, size = 0x20000, scoped, tag = 'scratch operand']
  #allocation5 [shape = 'f32[256,1]{1,0:T(8,128)}', space=vmem, size = 0x20000, scoped, tag = 'scratch operand']
  #allocation6 [shape = 'f32[1]{0:T(128)S(6)}', space=smem, size = 0x200, scoped, tag = 'scoped memory for tpu_custom_call.1']
  %s0 = inlined_call_operand.vmem [shape: bf16[256,256], index: 0, kind: input, shape index: {}]
  %s1 = inlined_call_operand.vmem [shape: f32[256,48], index: 1, kind: input, shape index: {}]
  %s2 = inlined_call_operand.vmem [shape: f32[256,8], index: 2, kind: input, shape index: {}]
  %s3 = inlined_call_operand.vmem [shape: f32[256,3], index: 3, kind: input, shape index: {}]
  %s4 = inlined_call_operand.vmem [shape: f32[8,16], index: 4, kind: input, shape index: {}]
  %s5 = inlined_call_operand.vmem [shape: f32[1,16], index: 5, kind: input, shape index: {}]
  %s6 = inlined_call_operand.vmem [shape: f32[2], index: 6, kind: input, shape index: {}]
  %s7 = inlined_call_operand.<no memory space> [shape: f32[1], index: 7, kind: input, shape index: {}]
  %s8 = inlined_call_operand.vmem [shape: f32[256,8], index: 8, kind: output, shape index: {}]
  %s9 = sld [smem:[#allocation0]]
  $region89: #{tpu_custom_call.1} parent=0
    _
  %s11 = ssub.s32 1, %s9
  %s12 = scalar_select 0, %s11, %s9
  %13 = sst [smem:[#allocation6]] %s7
  $region1: #{tpu_custom_call.1} parent=0
    #allocation7 [shape = 'u8[512]{0}', space=smem, size = 0x200, scoped, tag = 'input window, operand 6, single buffered']
    #allocation8 [shape = 's32[2]{0}', space=sflag, size = 0x8, scoped, tag = 'scoped memory for tpu_custom_call.1']
    %14 = vsyncpa [#allocation8], 0
    loop: start=0, step=1, limit=12
    $region2: #{tpu_custom_call.1} parent=1 // loop_pre_header
      _
    $region3: #{tpu_custom_call.1} parent=1 // loop_header
      %s16 = sphi 0, %s20
      %p17 = scmp.ge.s32.totalorder %s16, 12
      %s23 = sphi 0, %s35
      %s24 = sphi 0, %s31
      %s25 = sphi 0, %s23
      %s26 = sphi 0, %s24
      %s27 = sphi 0, %s25
      %s28 = sphi 0, %s26
      %s38 = sphi 0, %s40
      %s41 = sphi 0, %s38
      %s42 = sphi 0, %s41
      %s58 = sphi 0, %s42
      %s64 = sphi 0, %s66
      %s67 = sphi 0, %s64
      %s68 = sphi 0, %s67
      %s84 = sphi 0, %s68
      %s90 = sphi 0, %s92
      %s93 = sphi 0, %s90
      %s94 = sphi 0, %s93
      %s110 = sphi 0, %s94
      %s116 = sphi 0, %s118
      %s119 = sphi 0, %s116
      %s120 = sphi 0, %s119
      %s136 = sphi 0, %s120
      %s140 = sphi 0, %s140
      %s142 = sphi 0, %s140
      %s143 = sphi 0, %s142
      %s157 = sphi 0, %s143
      %s161 = sphi 0, %s161
      %s163 = sphi 0, %s161
      %s164 = sphi 0, %s163
      %s178 = sphi 0, %s164
      %s182 = sphi 0, %s182
      %s184 = sphi 0, %s182
      %s185 = sphi 0, %s184
      %s199 = sphi 0, %s185
      %s203 = sphi 0, %s203
      %s205 = sphi 0, %s203
      %s206 = sphi 0, %s205
      %s220 = sphi 0, %s206
      %s226 = sphi 0, %s228
      %s229 = sphi 0, %s226
      %s230 = sphi 0, %s229
      %s246 = sphi 0, %s230
    $region4: #{tpu_custom_call.1} parent=1 // loop_header_branch
      %19 = sbr.rel (%p17) target = $region8
    $region5: #{tpu_custom_call.1} parent=1 // loop_body
      %s21 = ssub.s32 %s16, 1
      %s22 = ssub.s32 %s16, 2
      %s29 = sadd.s32 1, %s24
      %p30 = scmp.ge.s32.totalorder %s29, 2
      %s31 = scalar_select %p30, 0, %s29
      %s32 = sadd.s32 1, %s23
      %s33 = scalar_select %p30, %s32, %s23
      %p34 = scmp.ge.s32.totalorder %s33, 5
      %s35 = scalar_select %p34, 0, %s33
      %s36 = ssub.s32 %s24, %s31
      %p37 = scmp.eq.s32.totalorder %s36, 0
      %s39 = sadd.s32 %s38, 1
      %s40 = scalar_select %p37, %s38, %s39
      %p43 = pneg %p37
      %p44 = scmp.eq.s32.totalorder %s16, 9
      %p45 = por %p43, %p44
      %p46 = scmp.ne.s32.totalorder %s38, %s41
      %p47 = scmp.eq.s32.totalorder %s16, 0
      %p48 = por %p46, %p47
      %p49 = scmp.ne.s32.totalorder %s38, %s41
      %p50 = scmp.eq.s32.totalorder %s21, 9
      %p51 = por %p49, %p50
      %p52 = scmp.ne.s32.totalorder %s41, %s42
      %p53 = scmp.eq.s32.totalorder %s21, 0
      %p54 = por %p52, %p53
      %p55 = scmp.ne.s32.totalorder %s41, %s42
      %p56 = scmp.eq.s32.totalorder %s22, 9
      %p57 = por %p55, %p56
      %p59 = scmp.ne.s32.totalorder %s42, %s58
      %p60 = scmp.eq.s32.totalorder %s22, 0
      %p61 = por %p59, %p60
      %s62 = ssub.s32 %s24, %s31
      %p63 = scmp.eq.s32.totalorder %s62, 0
      %s65 = sadd.s32 %s64, 1
      %s66 = scalar_select %p63, %s64, %s65
      %p69 = pneg %p63
      %p70 = scmp.eq.s32.totalorder %s16, 9
      %p71 = por %p69, %p70
      %p72 = scmp.ne.s32.totalorder %s64, %s67
      %p73 = scmp.eq.s32.totalorder %s16, 0
      %p74 = por %p72, %p73
      %p75 = scmp.ne.s32.totalorder %s64, %s67
      %p76 = scmp.eq.s32.totalorder %s21, 9
      %p77 = por %p75, %p76
      %p78 = scmp.ne.s32.totalorder %s67, %s68
      %p79 = scmp.eq.s32.totalorder %s21, 0
      %p80 = por %p78, %p79
      %p81 = scmp.ne.s32.totalorder %s67, %s68
      %p82 = scmp.eq.s32.totalorder %s22, 9
      %p83 = por %p81, %p82
      %p85 = scmp.ne.s32.totalorder %s68, %s84
      %p86 = scmp.eq.s32.totalorder %s22, 0
      %p87 = por %p85, %p86
      %s88 = ssub.s32 %s24, %s31
      %p89 = scmp.eq.s32.totalorder %s88, 0
      %s91 = sadd.s32 %s90, 1
      %s92 = scalar_select %p89, %s90, %s91
      %p95 = pneg %p89
      %p96 = scmp.eq.s32.totalorder %s16, 9
      %p97 = por %p95, %p96
      %p98 = scmp.ne.s32.totalorder %s90, %s93
      %p99 = scmp.eq.s32.totalorder %s16, 0
      %p100 = por %p98, %p99
      %p101 = scmp.ne.s32.totalorder %s90, %s93
      %p102 = scmp.eq.s32.totalorder %s21, 9
      %p103 = por %p101, %p102
      %p104 = scmp.ne.s32.totalorder %s93, %s94
      %p105 = scmp.eq.s32.totalorder %s21, 0
      %p106 = por %p104, %p105
      %p107 = scmp.ne.s32.totalorder %s93, %s94
      %p108 = scmp.eq.s32.totalorder %s22, 9
      %p109 = por %p107, %p108
      %p111 = scmp.ne.s32.totalorder %s94, %s110
      %p112 = scmp.eq.s32.totalorder %s22, 0
      %p113 = por %p111, %p112
      %s114 = ssub.s32 %s24, %s31
      %p115 = scmp.eq.s32.totalorder %s114, 0
      %s117 = sadd.s32 %s116, 1
      %s118 = scalar_select %p115, %s116, %s117
      %p121 = pneg %p115
      %p122 = scmp.eq.s32.totalorder %s16, 9
      %p123 = por %p121, %p122
      %p124 = scmp.ne.s32.totalorder %s116, %s119
      %p125 = scmp.eq.s32.totalorder %s16, 0
      %p126 = por %p124, %p125
      %p127 = scmp.ne.s32.totalorder %s116, %s119
      %p128 = scmp.eq.s32.totalorder %s21, 9
      %p129 = por %p127, %p128
      %p130 = scmp.ne.s32.totalorder %s119, %s120
      %p131 = scmp.eq.s32.totalorder %s21, 0
      %p132 = por %p130, %p131
      %p133 = scmp.ne.s32.totalorder %s119, %s120
      %p134 = scmp.eq.s32.totalorder %s22, 9
      %p135 = por %p133, %p134
      %p137 = scmp.ne.s32.totalorder %s120, %s136
      %p138 = scmp.eq.s32.totalorder %s22, 0
      %p139 = por %p137, %p138
      %s141 = sadd.s32 %s140, 1
      %p144 = scmp.eq.s32.totalorder %s16, 9
      %p145 = scmp.ne.s32.totalorder %s140, %s142
      %p146 = scmp.eq.s32.totalorder %s16, 0
      %p147 = por %p145, %p146
      %p148 = scmp.ne.s32.totalorder %s140, %s142
      %p149 = scmp.eq.s32.totalorder %s21, 9
      %p150 = por %p148, %p149
      %p151 = scmp.ne.s32.totalorder %s142, %s143
      %p152 = scmp.eq.s32.totalorder %s21, 0
      %p153 = por %p151, %p152
      %p154 = scmp.ne.s32.totalorder %s142, %s143
      %p155 = scmp.eq.s32.totalorder %s22, 9
      %p156 = por %p154, %p155
      %p158 = scmp.ne.s32.totalorder %s143, %s157
      %p159 = scmp.eq.s32.totalorder %s22, 0
      %p160 = por %p158, %p159
      %s162 = sadd.s32 %s161, 1
      %p165 = scmp.eq.s32.totalorder %s16, 9
      %p166 = scmp.ne.s32.totalorder %s161, %s163
      %p167 = scmp.eq.s32.totalorder %s16, 0
      %p168 = por %p166, %p167
      %p169 = scmp.ne.s32.totalorder %s161, %s163
      %p170 = scmp.eq.s32.totalorder %s21, 9
      %p171 = por %p169, %p170
      %p172 = scmp.ne.s32.totalorder %s163, %s164
      %p173 = scmp.eq.s32.totalorder %s21, 0
      %p174 = por %p172, %p173
      %p175 = scmp.ne.s32.totalorder %s163, %s164
      %p176 = scmp.eq.s32.totalorder %s22, 9
      %p177 = por %p175, %p176
      %p179 = scmp.ne.s32.totalorder %s164, %s178
      %p180 = scmp.eq.s32.totalorder %s22, 0
      %p181 = por %p179, %p180
      %s183 = sadd.s32 %s182, 1
      %p186 = scmp.eq.s32.totalorder %s16, 9
      %p187 = scmp.ne.s32.totalorder %s182, %s184
      %p188 = scmp.eq.s32.totalorder %s16, 0
      %p189 = por %p187, %p188
      %p190 = scmp.ne.s32.totalorder %s182, %s184
      %p191 = scmp.eq.s32.totalorder %s21, 9
      %p192 = por %p190, %p191
      %p193 = scmp.ne.s32.totalorder %s184, %s185
      %p194 = scmp.eq.s32.totalorder %s21, 0
      %p195 = por %p193, %p194
      %p196 = scmp.ne.s32.totalorder %s184, %s185
      %p197 = scmp.eq.s32.totalorder %s22, 9
      %p198 = por %p196, %p197
      %p200 = scmp.ne.s32.totalorder %s185, %s199
      %p201 = scmp.eq.s32.totalorder %s22, 0
      %p202 = por %p200, %p201
      %s204 = sadd.s32 %s203, 1
      %p207 = scmp.eq.s32.totalorder %s16, 9
      %p208 = scmp.ne.s32.totalorder %s203, %s205
      %p209 = scmp.eq.s32.totalorder %s16, 0
      %p210 = por %p208, %p209
      %p211 = scmp.ne.s32.totalorder %s203, %s205
      %p212 = scmp.eq.s32.totalorder %s21, 9
      %p213 = por %p211, %p212
      %p214 = scmp.ne.s32.totalorder %s205, %s206
      %p215 = scmp.eq.s32.totalorder %s21, 0
      %p216 = por %p214, %p215
      %p217 = scmp.ne.s32.totalorder %s205, %s206
      %p218 = scmp.eq.s32.totalorder %s22, 9
      %p219 = por %p217, %p218
      %p221 = scmp.ne.s32.totalorder %s206, %s220
      %p222 = scmp.eq.s32.totalorder %s22, 0
      %p223 = por %p221, %p222
      %s224 = ssub.s32 %s24, %s31
      %p225 = scmp.eq.s32.totalorder %s224, 0
      %s227 = sadd.s32 %s226, 1
      %s228 = scalar_select %p225, %s226, %s227
      %p231 = pneg %p225
      %p232 = scmp.eq.s32.totalorder %s16, 9
      %p233 = por %p231, %p232
      %p234 = scmp.ne.s32.totalorder %s226, %s229
      %p235 = scmp.eq.s32.totalorder %s16, 0
      %p236 = por %p234, %p235
      %p237 = scmp.ne.s32.totalorder %s226, %s229
      %p238 = scmp.eq.s32.totalorder %s21, 9
      %p239 = por %p237, %p238
      %p240 = scmp.ne.s32.totalorder %s229, %s230
      %p241 = scmp.eq.s32.totalorder %s21, 0
      %p242 = por %p240, %p241
      %p243 = scmp.ne.s32.totalorder %s229, %s230
      %p244 = scmp.eq.s32.totalorder %s22, 9
      %p245 = por %p243, %p244
      %p247 = scmp.ne.s32.totalorder %s230, %s246
      %p248 = scmp.eq.s32.totalorder %s22, 0
      %p249 = por %p247, %p248
      %p250 = scmp.le.s32.totalorder 1, %s16
      %p251 = scmp.lt.s32.totalorder %s16, 11
      %p252 = pnand %p250, %p251
      %p253 = pneg %p252
      // Predicated region
      $region9: #{tpu_custom_call.1} parent=5 // pred_check
        _
      $region10: #{tpu_custom_call.1} parent=5 // pred_check_branch
        %255 = sbr.rel (%p252) target = $region12
      $region11: #{tpu_custom_call.1} parent=5 // pred_region
        %s256 = ssub.s32 %s16, 1
        // Predicated region
        $region13: #{tpu_custom_call.1} parent=11 // pred_check
          %p257 = pneg %p153
        $region14: #{tpu_custom_call.1} parent=11 // pred_check_branch
          %259 = sbr.rel (%p257) target = $region16
        $region15: #{tpu_custom_call.1} parent=11 // pred_region
          _
        $region16: #{tpu_custom_call.1} parent=11 // pred_fallthru
          _
        // Predicated region
        $region17: #{tpu_custom_call.1} parent=11 // pred_check
          %p260 = pneg %p174
        $region18: #{tpu_custom_call.1} parent=11 // pred_check_branch
          %262 = sbr.rel (%p260) target = $region20
        $region19: #{tpu_custom_call.1} parent=11 // pred_region
          _
        $region20: #{tpu_custom_call.1} parent=11 // pred_fallthru
          _
        // Predicated region
        $region21: #{tpu_custom_call.1} parent=11 // pred_check
          %p263 = pneg %p195
        $region22: #{tpu_custom_call.1} parent=11 // pred_check_branch
          %265 = sbr.rel (%p263) target = $region24
        $region23: #{tpu_custom_call.1} parent=11 // pred_region
          %s267 = ssub.s32 16, 16
          %268 = vsyncadd [#allocation8], %s267
          %s270 = sshll.u32 %s6, 4
          %s271 = int_to_ptr.vmem [resolvable:$true] %s270
          %273 = dma.vmem_to_smem %s271, 16, [#allocation7], [#allocation8]
        $region24: #{tpu_custom_call.1} parent=11 // pred_fallthru
          _
        // Predicated region
        $region25: #{tpu_custom_call.1} parent=11 // pred_check
          %p274 = pneg %p216
        $region26: #{tpu_custom_call.1} parent=11 // pred_check_branch
          %276 = sbr.rel (%p274) target = $region28
        $region27: #{tpu_custom_call.1} parent=11 // pred_region
          _
        $region28: #{tpu_custom_call.1} parent=11 // pred_fallthru
          _
      $region12: #{tpu_custom_call.1} parent=5 // pred_fallthru
        _
      %p277 = scmp.lt.s32.totalorder %s16, 10
      // Predicated region
      $region29: #{tpu_custom_call.1} parent=5 // pred_check
        %p278 = pneg %p277
      $region30: #{tpu_custom_call.1} parent=5 // pred_check_branch
        %280 = sbr.rel (%p278) target = $region32
      $region31: #{tpu_custom_call.1} parent=5 // pred_region
        // Predicated region
        $region33: #{tpu_custom_call.1} parent=31 // pred_check
          %p281 = pneg %p48
        $region34: #{tpu_custom_call.1} parent=31 // pred_check_branch
          %283 = sbr.rel (%p281) target = $region36
        $region35: #{tpu_custom_call.1} parent=31 // pred_region
          %s284 = smul.u32 16, %s24
          %p285 = scmp.lt.s32.totalorder %s284, 31
          %s286 = scalar_select %p285, %s284, 31
          %s287 = smul.addr %s286, 2
          %s288 = smul.addr %s287, 4
          %s289 = scalar_lea.vmem %s0, %s288
          %s290 = smul.u32 16, %s24
        $region36: #{tpu_custom_call.1} parent=31 // pred_fallthru
          _
        // Predicated region
        $region37: #{tpu_custom_call.1} parent=31 // pred_check
          %p291 = pneg %p74
        $region38: #{tpu_custom_call.1} parent=31 // pred_check_branch
          %293 = sbr.rel (%p291) target = $region40
        $region39: #{tpu_custom_call.1} parent=31 // pred_region
          %s294 = smul.u32 16, %s24
          %p295 = scmp.lt.s32.totalorder %s294, 31
          %s296 = scalar_select %p295, %s294, 31
          %s297 = smul.addr %s296, 8
          %s298 = scalar_lea.vmem %s1, %s297
          %s299 = smul.u32 16, %s24
        $region40: #{tpu_custom_call.1} parent=31 // pred_fallthru
          _
        // Predicated region
        $region41: #{tpu_custom_call.1} parent=31 // pred_check
          %p300 = pneg %p100
        $region42: #{tpu_custom_call.1} parent=31 // pred_check_branch
          %302 = sbr.rel (%p300) target = $region44
        $region43: #{tpu_custom_call.1} parent=31 // pred_region
          %s303 = smul.u32 16, %s24
          %p304 = scmp.lt.s32.totalorder %s303, 31
          %s305 = scalar_select %p304, %s303, 31
          %s306 = smul.addr %s305, 8
          %s307 = scalar_lea.vmem %s2, %s306
          %s308 = smul.u32 16, %s24
        $region44: #{tpu_custom_call.1} parent=31 // pred_fallthru
          _
        // Predicated region
        $region45: #{tpu_custom_call.1} parent=31 // pred_check
          %p309 = pneg %p126
        $region46: #{tpu_custom_call.1} parent=31 // pred_check_branch
          %311 = sbr.rel (%p309) target = $region48
        $region47: #{tpu_custom_call.1} parent=31 // pred_region
          %s312 = smul.u32 16, %s24
          %p313 = scmp.lt.s32.totalorder %s312, 31
          %s314 = scalar_select %p313, %s312, 31
          %s315 = smul.addr %s314, 8
          %s316 = scalar_lea.vmem %s3, %s315
          %s317 = smul.u32 16, %s24
        $region48: #{tpu_custom_call.1} parent=31 // pred_fallthru
          _
      $region32: #{tpu_custom_call.1} parent=5 // pred_fallthru
        _
      %p318 = scmp.le.s32.totalorder 1, %s16
      %p319 = scmp.lt.s32.totalorder %s16, 11
      %p320 = pnand %p318, %p319
      %p321 = pneg %p320
      // Predicated region
      $region49: #{tpu_custom_call.1} parent=5 // pred_check
        _
      $region50: #{tpu_custom_call.1} parent=5 // pred_check_branch
        %323 = sbr.rel (%p320) target = $region52
      $region51: #{tpu_custom_call.1} parent=5 // pred_region
        %s324 = ssub.s32 %s16, 1
        // Predicated region
        $region53: #{tpu_custom_call.1} parent=51 // pred_check
          %p325 = pneg %p195
        $region54: #{tpu_custom_call.1} parent=51 // pred_check_branch
          %327 = sbr.rel (%p325) target = $region56
        $region55: #{tpu_custom_call.1} parent=51 // pred_region
          %328 = dma.done [#allocation8], 16
        $region56: #{tpu_custom_call.1} parent=51 // pred_fallthru
          _
        %329 = sfence
        %s330 = smul.u32 16, %s26
        %p331 = scmp.lt.s32.totalorder %s330, 31
        %s332 = scalar_select %p331, %s330, 31
        %s333 = smul.addr %s332, 2
        %s334 = smul.addr %s333, 4
        %s335 = scalar_lea.vmem %s0, %s334
        %p336 = pneg %p54
        %p337 = pneg %p51
        %s338 = smul.u32 16, %s26
        %p339 = scmp.lt.s32.totalorder %s338, 31
        %s340 = scalar_select %p339, %s338, 31
        %s341 = smul.addr %s340, 8
        %s342 = scalar_lea.vmem %s1, %s341
        %p343 = pneg %p80
        %p344 = pneg %p77
        %s345 = smul.u32 16, %s26
        %p346 = scmp.lt.s32.totalorder %s345, 31
        %s347 = scalar_select %p346, %s345, 31
        %s348 = smul.addr %s347, 8
        %s349 = scalar_lea.vmem %s2, %s348
        %p350 = pneg %p106
        %p351 = pneg %p103
        %s352 = smul.u32 16, %s26
        %p353 = scmp.lt.s32.totalorder %s352, 31
        %s354 = scalar_select %p353, %s352, 31
        %s355 = smul.addr %s354, 8
        %s356 = scalar_lea.vmem %s3, %s355
        %p357 = pneg %p132
        %p358 = pneg %p129
        %p359 = pneg %p153
        %p360 = pneg %p150
        %p361 = pneg %p174
        %p362 = pneg %p171
        %p363 = pneg %p195
        %p364 = pneg %p192
        %p365 = pneg %p216
        %p366 = pneg %p213
        %p367 = pneg %p242
        %p368 = pneg %p239
        %s369 = smul.u32 16, %s26
        %p370 = scmp.lt.s32.totalorder %s369, 31
        %s371 = scalar_select %p370, %s369, 31
        %s372 = smul.addr %s371, 8
        %s373 = scalar_lea.vmem %s8, %s372
        %s374 = smul.u32 16, %s26
        %p375 = scmp.lt.s32.totalorder %s374, 31
        %s376 = scalar_select %p375, %s374, 31
        %s377 = smul.addr %s376, 2
        %s378 = smul.addr %s377, 4
        %s379 = scalar_lea.vmem %s0, %s378
        %s380 = smul.u32 16, %s26
        %s381 = smul.u32 16, %s26
        %p382 = scmp.lt.s32.totalorder %s381, 31
        %s383 = scalar_select %p382, %s381, 31
        %s384 = smul.addr %s383, 8
        %s385 = scalar_lea.vmem %s1, %s384
        %s386 = smul.u32 16, %s26
        %s387 = smul.u32 16, %s26
        %p388 = scmp.lt.s32.totalorder %s387, 31
        %s389 = scalar_select %p388, %s387, 31
        %s390 = smul.addr %s389, 8
        %s391 = scalar_lea.vmem %s2, %s390
        %s392 = smul.u32 16, %s26
        %s393 = smul.u32 16, %s26
        %p394 = scmp.lt.s32.totalorder %s393, 31
        %s395 = scalar_select %p394, %s393, 31
        %s396 = smul.addr %s395, 8
        %s397 = scalar_lea.vmem %s3, %s396
        %s398 = smul.u32 16, %s26
        %s399 = smul.u32 16, %s26
        %p400 = scmp.lt.s32.totalorder %s399, 31
        %s401 = scalar_select %p400, %s399, 31
        %s402 = smul.addr %s401, 8
        %s403 = scalar_lea.vmem %s8, %s402
        %s404 = smul.u32 16, %s26
        %s406 = smul.u32 %s26, 128
        %p407 = scmp.eq.s32.totalorder %s25, 0
        // Predicated region
        $region57: #{tpu_custom_call.1} parent=51 // pred_check
          %p408 = pneg %p407
        $region58: #{tpu_custom_call.1} parent=51 // pred_check_branch
          %410 = sbr.rel (%p408) target = $region60
        $region59: #{tpu_custom_call.1} parent=51 // pred_region
          %v411 = vld [vmem:[%s379] sm:$0xff]
          %v412 = vld [vmem:[%s379 + $0x8] sm:$0xff]
          %v413 = vld [vmem:[%s379 + $0x10] sm:$0xff]
          %v414 = vld [vmem:[%s379 + $0x18] sm:$0xff]
          %v415 = vld [vmem:[%s379 + $0x20] sm:$0xff]
          %v416 = vld [vmem:[%s379 + $0x28] sm:$0xff]
          %v417 = vld [vmem:[%s379 + $0x30] sm:$0xff]
          %v418 = vld [vmem:[%s379 + $0x38] sm:$0xff]
          %v419 = vld [vmem:[%s379 + $0x40] sm:$0xff]
          %v420 = vld [vmem:[%s379 + $0x48] sm:$0xff]
          %v421 = vld [vmem:[%s379 + $0x50] sm:$0xff]
          %v422 = vld [vmem:[%s379 + $0x58] sm:$0xff]
          %v423 = vld [vmem:[%s379 + $0x60] sm:$0xff]
          %v424 = vld [vmem:[%s379 + $0x68] sm:$0xff]
          %v425 = vld [vmem:[%s379 + $0x70] sm:$0xff]
          %v426 = vld [vmem:[%s379 + $0x78] sm:$0xff]
          %v427 = vunpack.c.l.bf16 %v411
          %v428 = vunpack.c.h.bf16 %v411
          %v429 = vunpack.c.l.bf16 %v412
          %v430 = vunpack.c.h.bf16 %v412
          %v431 = vunpack.c.l.bf16 %v413
          %v432 = vunpack.c.h.bf16 %v413
          %v433 = vunpack.c.l.bf16 %v414
          %v434 = vunpack.c.h.bf16 %v414
          %v435 = vunpack.c.l.bf16 %v415
          %v436 = vunpack.c.h.bf16 %v415
          %v437 = vunpack.c.l.bf16 %v416
          %v438 = vunpack.c.h.bf16 %v416
          %v439 = vunpack.c.l.bf16 %v417
          %v440 = vunpack.c.h.bf16 %v417
          %v441 = vunpack.c.l.bf16 %v418
          %v442 = vunpack.c.h.bf16 %v418
          %v443 = vunpack.c.l.bf16 %v419
          %v444 = vunpack.c.h.bf16 %v419
          %v445 = vunpack.c.l.bf16 %v420
          %v446 = vunpack.c.h.bf16 %v420
          %v447 = vunpack.c.l.bf16 %v421
          %v448 = vunpack.c.h.bf16 %v421
          %v449 = vunpack.c.l.bf16 %v422
          %v450 = vunpack.c.h.bf16 %v422
          %v451 = vunpack.c.l.bf16 %v423
          %v452 = vunpack.c.h.bf16 %v423
          %v453 = vunpack.c.l.bf16 %v424
          %v454 = vunpack.c.h.bf16 %v424
          %v455 = vunpack.c.l.bf16 %v425
          %v456 = vunpack.c.h.bf16 %v425
          %v457 = vunpack.c.l.bf16 %v426
          %v458 = vunpack.c.h.bf16 %v426
          %v459 = vadd.f32 %v427, %v428
          %460 = vadd.xlane.f32.xlu0 %v459
          %v461 = vpop.xlane.xlu0 %460
          %v462 = vadd.f32 %v429, %v430
          %463 = vadd.xlane.f32.xlu0 %v462
          %v464 = vpop.xlane.xlu0 %463
          %v465 = vadd.f32 %v431, %v432
          %466 = vadd.xlane.f32.xlu0 %v465
          %v467 = vpop.xlane.xlu0 %466
          %v468 = vadd.f32 %v433, %v434
          %469 = vadd.xlane.f32.xlu0 %v468
          %v470 = vpop.xlane.xlu0 %469
          %v471 = vadd.f32 %v435, %v436
          %472 = vadd.xlane.f32.xlu0 %v471
          %v473 = vpop.xlane.xlu0 %472
          %v474 = vadd.f32 %v437, %v438
          %475 = vadd.xlane.f32.xlu0 %v474
          %v476 = vpop.xlane.xlu0 %475
          %v477 = vadd.f32 %v439, %v440
          %478 = vadd.xlane.f32.xlu0 %v477
          %v479 = vpop.xlane.xlu0 %478
          %v480 = vadd.f32 %v441, %v442
          %481 = vadd.xlane.f32.xlu0 %v480
          %v482 = vpop.xlane.xlu0 %481
          %v483 = vadd.f32 %v443, %v444
          %484 = vadd.xlane.f32.xlu0 %v483
          %v485 = vpop.xlane.xlu0 %484
          %v486 = vadd.f32 %v445, %v446
          %487 = vadd.xlane.f32.xlu0 %v486
          %v488 = vpop.xlane.xlu0 %487
          %v489 = vadd.f32 %v447, %v448
          %490 = vadd.xlane.f32.xlu0 %v489
          %v491 = vpop.xlane.xlu0 %490
          %v492 = vadd.f32 %v449, %v450
          %493 = vadd.xlane.f32.xlu0 %v492
          %v494 = vpop.xlane.xlu0 %493
          %v495 = vadd.f32 %v451, %v452
          %496 = vadd.xlane.f32.xlu0 %v495
          %v497 = vpop.xlane.xlu0 %496
          %v498 = vadd.f32 %v453, %v454
          %499 = vadd.xlane.f32.xlu0 %v498
          %v500 = vpop.xlane.xlu0 %499
          %v501 = vadd.f32 %v455, %v456
          %502 = vadd.xlane.f32.xlu0 %v501
          %v503 = vpop.xlane.xlu0 %502
          %v504 = vadd.f32 %v457, %v458
          %505 = vadd.xlane.f32.xlu0 %v504
          %v506 = vpop.xlane.xlu0 %505
          %v507 = vadd.f32 %v461, 1.0
          %v508 = vadd.f32 %v464, 1.0
          %v509 = vadd.f32 %v467, 1.0
          %v510 = vadd.f32 %v470, 1.0
          %v511 = vadd.f32 %v473, 1.0
          %v512 = vadd.f32 %v476, 1.0
          %v513 = vadd.f32 %v479, 1.0
          %v514 = vadd.f32 %v482, 1.0
          %v515 = vadd.f32 %v485, 1.0
          %v516 = vadd.f32 %v488, 1.0
          %v517 = vadd.f32 %v491, 1.0
          %v518 = vadd.f32 %v494, 1.0
          %v519 = vadd.f32 %v497, 1.0
          %v520 = vadd.f32 %v500, 1.0
          %v521 = vadd.f32 %v503, 1.0
          %v522 = vadd.f32 %v506, 1.0
          %vm523 = vcmp.gt.f32.partialorder %v507, 0.0
          %vm524 = vcmp.gt.f32.partialorder %v508, 0.0
          %vm525 = vcmp.gt.f32.partialorder %v509, 0.0
          %vm526 = vcmp.gt.f32.partialorder %v510, 0.0
          %vm527 = vcmp.gt.f32.partialorder %v511, 0.0
          %vm528 = vcmp.gt.f32.partialorder %v512, 0.0
          %vm529 = vcmp.gt.f32.partialorder %v513, 0.0
          %vm530 = vcmp.gt.f32.partialorder %v514, 0.0
          %vm531 = vcmp.gt.f32.partialorder %v515, 0.0
          %vm532 = vcmp.gt.f32.partialorder %v516, 0.0
          %vm533 = vcmp.gt.f32.partialorder %v517, 0.0
          %vm534 = vcmp.gt.f32.partialorder %v518, 0.0
          %vm535 = vcmp.gt.f32.partialorder %v519, 0.0
          %vm536 = vcmp.gt.f32.partialorder %v520, 0.0
          %vm537 = vcmp.gt.f32.partialorder %v521, 0.0
          %vm538 = vcmp.gt.f32.partialorder %v522, 0.0
          %v539 = vrsqrt.pop %v507
          %v540 = vrsqrt.pop %v508
          %v541 = vrsqrt.pop %v509
          %v542 = vrsqrt.pop %v510
          %v543 = vrsqrt.pop %v511
          %v544 = vrsqrt.pop %v512
          %v545 = vrsqrt.pop %v513
          %v546 = vrsqrt.pop %v514
          %v547 = vrsqrt.pop %v515
          %v548 = vrsqrt.pop %v516
          %v549 = vrsqrt.pop %v517
          %v550 = vrsqrt.pop %v518
          %v551 = vrsqrt.pop %v519
          %v552 = vrsqrt.pop %v520
          %v553 = vrsqrt.pop %v521
          %v554 = vrsqrt.pop %v522
          %v555 = vsel %vm523, %v539, 0.0
          %v556 = vsel %vm524, %v540, 0.0
          %v557 = vsel %vm525, %v541, 0.0
          %v558 = vsel %vm526, %v542, 0.0
          %v559 = vsel %vm527, %v543, 0.0
          %v560 = vsel %vm528, %v544, 0.0
          %v561 = vsel %vm529, %v545, 0.0
          %v562 = vsel %vm530, %v546, 0.0
          %v563 = vsel %vm531, %v547, 0.0
          %v564 = vsel %vm532, %v548, 0.0
          %v565 = vsel %vm533, %v549, 0.0
          %v566 = vsel %vm534, %v550, 0.0
          %v567 = vsel %vm535, %v551, 0.0
          %v568 = vsel %vm536, %v552, 0.0
          %v569 = vsel %vm537, %v553, 0.0
          %v570 = vsel %vm538, %v554, 0.0
          %s571 = scalar_lea.vmem [#allocation5], %s406
          %vm572 = vcmask 7168
          %573 = vst.msk [vmem:[%s571] sm:$0xff] %vm572, %v555
          %574 = vst.msk [vmem:[%s571 + $0x8] sm:$0xff] %vm572, %v556
          %575 = vst.msk [vmem:[%s571 + $0x10] sm:$0xff] %vm572, %v557
          %576 = vst.msk [vmem:[%s571 + $0x18] sm:$0xff] %vm572, %v558
          %577 = vst.msk [vmem:[%s571 + $0x20] sm:$0xff] %vm572, %v559
          %578 = vst.msk [vmem:[%s571 + $0x28] sm:$0xff] %vm572, %v560
          %579 = vst.msk [vmem:[%s571 + $0x30] sm:$0xff] %vm572, %v561
          %580 = vst.msk [vmem:[%s571 + $0x38] sm:$0xff] %vm572, %v562
          %581 = vst.msk [vmem:[%s571 + $0x40] sm:$0xff] %vm572, %v563
          %582 = vst.msk [vmem:[%s571 + $0x48] sm:$0xff] %vm572, %v564
          %583 = vst.msk [vmem:[%s571 + $0x50] sm:$0xff] %vm572, %v565
          %584 = vst.msk [vmem:[%s571 + $0x58] sm:$0xff] %vm572, %v566
          %585 = vst.msk [vmem:[%s571 + $0x60] sm:$0xff] %vm572, %v567
          %586 = vst.msk [vmem:[%s571 + $0x68] sm:$0xff] %vm572, %v568
          %587 = vst.msk [vmem:[%s571 + $0x70] sm:$0xff] %vm572, %v569
          %588 = vst.msk [vmem:[%s571 + $0x78] sm:$0xff] %vm572, %v570
          %v589 = vld [vmem:[%s391] sm:$0xff]
          %v590 = vld [vmem:[%s391 + $0x8] sm:$0xff]
          %v591 = vld [vmem:[%s391 + $0x10] sm:$0xff]
          %v592 = vld [vmem:[%s391 + $0x18] sm:$0xff]
          %v593 = vld [vmem:[%s391 + $0x20] sm:$0xff]
          %v594 = vld [vmem:[%s391 + $0x28] sm:$0xff]
          %v595 = vld [vmem:[%s391 + $0x30] sm:$0xff]
          %v596 = vld [vmem:[%s391 + $0x38] sm:$0xff]
          %v597 = vld [vmem:[%s391 + $0x40] sm:$0xff]
          %v598 = vld [vmem:[%s391 + $0x48] sm:$0xff]
          %v599 = vld [vmem:[%s391 + $0x50] sm:$0xff]
          %v600 = vld [vmem:[%s391 + $0x58] sm:$0xff]
          %v601 = vld [vmem:[%s391 + $0x60] sm:$0xff]
          %v602 = vld [vmem:[%s391 + $0x68] sm:$0xff]
          %v603 = vld [vmem:[%s391 + $0x70] sm:$0xff]
          %v604 = vld [vmem:[%s391 + $0x78] sm:$0xff]
          %v605 = vld [vmem:[%s4] sm:$0xff]
          %v606 = vld [vmem:[%s5] sm:$0x1]
          %v608 = vlaneseq
          %v609 = vshrl.u32 %v608, 7
          %v610 = vsub.s32 0, %v609
          %v611 = vrot.slane %v606, %v610
          %vm613 = vcmask 64512
          %v615 = vsel %vm613, %v589, 0
          %v618 = vsel %vm613, %v590, 0
          %v621 = vsel %vm613, %v591, 0
          %v624 = vsel %vm613, %v592, 0
          %v627 = vsel %vm613, %v593, 0
          %v630 = vsel %vm613, %v594, 0
          %v633 = vsel %vm613, %v595, 0
          %v636 = vsel %vm613, %v596, 0
          %v639 = vsel %vm613, %v597, 0
          %v642 = vsel %vm613, %v598, 0
          %v645 = vsel %vm613, %v599, 0
          %v648 = vsel %vm613, %v600, 0
          %v651 = vsel %vm613, %v601, 0
          %v654 = vsel %vm613, %v602, 0
          %v657 = vsel %vm613, %v603, 0
          %v660 = vsel %vm613, %v604, 0
          %662 = vmatprep.subr.mxu0 0.0
          %663 = vmatpush1.msra.mxu0 0.0
          %664 = vmatprep.subr.mxu0 0.0
          %665 = vmatpush1.msra.mxu0 0.0
          %666 = vmatprep.subr.mxu0 0.0
          %667 = vmatpush1.msra.mxu0 0.0
          %668 = vmatprep.subr.mxu0 0.0
          %669 = vmatpush1.msra.mxu0 0.0
          %670 = vmatprep.subr.mxu0 0.0
          %671 = vmatpush1.msra.mxu0 0.0
          %672 = vmatprep.subr.mxu0 0.0
          %673 = vmatpush1.msra.mxu0 0.0
          %674 = vmatprep.subr.mxu0 0.0
          %675 = vmatpush1.msra.mxu0 0.0
          %676 = vmatprep.subr.mxu0 0.0
          %677 = vmatpush1.msra.mxu0 0.0
          %678 = vmatprep.subr.mxu0 0.0
          %679 = vmatpush1.msra.mxu0 0.0
          %680 = vmatprep.subr.mxu0 0.0
          %681 = vmatpush1.msra.mxu0 0.0
          %682 = vmatprep.subr.mxu0 0.0
          %683 = vmatpush1.msra.mxu0 0.0
          %684 = vmatprep.subr.mxu0 0.0
          %685 = vmatpush1.msra.mxu0 0.0
          %686 = vmatprep.subr.mxu0 0.0
          %687 = vmatpush1.msra.mxu0 0.0
          %688 = vmatprep.subr.mxu0 0.0
          %689 = vmatpush1.msra.mxu0 0.0
          %690 = vmatprep.subr.mxu0 0.0
          %691 = vmatpush1.msra.mxu0 0.0
          %692 = vmatprep.subr.mxu0 0.0
          %693 = vmatpush1.msra.mxu0 %v605
          %694 = vmatprep.subr.mxu0 0.0
          %695 = vmatpush2.msra.mxu0 0.0
          %696 = vmatprep.subr.mxu0 0.0
          %697 = vmatpush2.msra.mxu0 0.0
          %698 = vmatprep.subr.mxu0 0.0
          %699 = vmatpush2.msra.mxu0 0.0
          %700 = vmatprep.subr.mxu0 0.0
          %701 = vmatpush2.msra.mxu0 0.0
          %702 = vmatprep.subr.mxu0 0.0
          %703 = vmatpush2.msra.mxu0 0.0
          %704 = vmatprep.subr.mxu0 0.0
          %705 = vmatpush2.msra.mxu0 0.0
          %706 = vmatprep.subr.mxu0 0.0
          %707 = vmatpush2.msra.mxu0 0.0
          %708 = vmatprep.subr.mxu0 0.0
          %709 = vmatpush2.msra.mxu0 0.0
          %710 = vmatprep.subr.mxu0 0.0
          %711 = vmatpush2.msra.mxu0 0.0
          %712 = vmatprep.subr.mxu0 0.0
          %713 = vmatpush2.msra.mxu0 0.0
          %714 = vmatprep.subr.mxu0 0.0
          %715 = vmatpush2.msra.mxu0 0.0
          %716 = vmatprep.subr.mxu0 0.0
          %717 = vmatpush2.msra.mxu0 0.0
          %718 = vmatprep.subr.mxu0 0.0
          %719 = vmatpush2.msra.mxu0 0.0
          %720 = vmatprep.subr.mxu0 0.0
          %721 = vmatpush2.msra.mxu0 0.0
          %722 = vmatprep.subr.mxu0 0.0
          %723 = vmatpush2.msra.mxu0 0.0
          %724 = vmatprep.subr.mxu0 0.0
          %725 = vmatpush2.msra.mxu0 0.0
          %726 = vmatprep.mubr.f32.mxu0 0.0
          %727 = vmatmul.mubr.f32.gmra.mxu0 %v615
          %v728 = vpop.f32.mrf.mxu0
          %v729 = vadd.f32 %v611, %v728
          %v730 = vpop.f32.mrf.mxu0
          %731 = vmatprep.mubr.f32.mxu0 0.0
          %732 = vmatmul.mubr.f32.gmra.mxu0 %v618
          %v733 = vpop.f32.mrf.mxu0
          %v734 = vadd.f32 %v611, %v733
          %v735 = vpop.f32.mrf.mxu0
          %736 = vmatprep.mubr.f32.mxu0 0.0
          %737 = vmatmul.mubr.f32.gmra.mxu0 %v621
          %v738 = vpop.f32.mrf.mxu0
          %v739 = vadd.f32 %v611, %v738
          %v740 = vpop.f32.mrf.mxu0
          %741 = vmatprep.mubr.f32.mxu0 0.0
          %742 = vmatmul.mubr.f32.gmra.mxu0 %v624
          %v743 = vpop.f32.mrf.mxu0
          %v744 = vadd.f32 %v611, %v743
          %v745 = vpop.f32.mrf.mxu0
          %746 = vmatprep.mubr.f32.mxu0 0.0
          %747 = vmatmul.mubr.f32.gmra.mxu0 %v627
          %v748 = vpop.f32.mrf.mxu0
          %v749 = vadd.f32 %v611, %v748
          %v750 = vpop.f32.mrf.mxu0
          %751 = vmatprep.mubr.f32.mxu0 0.0
          %752 = vmatmul.mubr.f32.gmra.mxu0 %v630
          %v753 = vpop.f32.mrf.mxu0
          %v754 = vadd.f32 %v611, %v753
          %v755 = vpop.f32.mrf.mxu0
          %756 = vmatprep.mubr.f32.mxu0 0.0
          %757 = vmatmul.mubr.f32.gmra.mxu0 %v633
          %v758 = vpop.f32.mrf.mxu0
          %v759 = vadd.f32 %v611, %v758
          %v760 = vpop.f32.mrf.mxu0
          %761 = vmatprep.mubr.f32.mxu0 0.0
          %762 = vmatmul.mubr.f32.gmra.mxu0 %v636
          %v763 = vpop.f32.mrf.mxu0
          %v764 = vadd.f32 %v611, %v763
          %v765 = vpop.f32.mrf.mxu0
          %766 = vmatprep.mubr.f32.mxu0 0.0
          %767 = vmatmul.mubr.f32.gmra.mxu0 %v639
          %v768 = vpop.f32.mrf.mxu0
          %v769 = vadd.f32 %v611, %v768
          %v770 = vpop.f32.mrf.mxu0
          %771 = vmatprep.mubr.f32.mxu0 0.0
          %772 = vmatmul.mubr.f32.gmra.mxu0 %v642
          %v773 = vpop.f32.mrf.mxu0
          %v774 = vadd.f32 %v611, %v773
          %v775 = vpop.f32.mrf.mxu0
          %776 = vmatprep.mubr.f32.mxu0 0.0
          %777 = vmatmul.mubr.f32.gmra.mxu0 %v645
          %v778 = vpop.f32.mrf.mxu0
          %v779 = vadd.f32 %v611, %v778
          %v780 = vpop.f32.mrf.mxu0
          %781 = vmatprep.mubr.f32.mxu0 0.0
          %782 = vmatmul.mubr.f32.gmra.mxu0 %v648
          %v783 = vpop.f32.mrf.mxu0
          %v784 = vadd.f32 %v611, %v783
          %v785 = vpop.f32.mrf.mxu0
          %786 = vmatprep.mubr.f32.mxu0 0.0
          %787 = vmatmul.mubr.f32.gmra.mxu0 %v651
          %v788 = vpop.f32.mrf.mxu0
          %v789 = vadd.f32 %v611, %v788
          %v790 = vpop.f32.mrf.mxu0
          %791 = vmatprep.mubr.f32.mxu0 0.0
          %792 = vmatmul.mubr.f32.gmra.mxu0 %v654
          %v793 = vpop.f32.mrf.mxu0
          %v794 = vadd.f32 %v611, %v793
          %v795 = vpop.f32.mrf.mxu0
          %796 = vmatprep.mubr.f32.mxu0 0.0
          %797 = vmatmul.mubr.f32.gmra.mxu0 %v657
          %v798 = vpop.f32.mrf.mxu0
          %v799 = vadd.f32 %v611, %v798
          %v800 = vpop.f32.mrf.mxu0
          %801 = vmatprep.mubr.f32.mxu0 0.0
          %802 = vmatmul.mubr.f32.gmra.mxu0 %v660
          %v803 = vpop.f32.mrf.mxu0
          %v804 = vadd.f32 %v611, %v803
          %v805 = vpop.f32.mrf.mxu0
          %806 = vdwg.mxu0
          %v807 = vmax.f32 %v729, 0.0
          %v808 = vmax.f32 %v734, 0.0
          %v809 = vmax.f32 %v739, 0.0
          %v810 = vmax.f32 %v744, 0.0
          %v811 = vmax.f32 %v749, 0.0
          %v812 = vmax.f32 %v754, 0.0
          %v813 = vmax.f32 %v759, 0.0
          %v814 = vmax.f32 %v764, 0.0
          %v815 = vmax.f32 %v769, 0.0
          %v816 = vmax.f32 %v774, 0.0
          %v817 = vmax.f32 %v779, 0.0
          %v818 = vmax.f32 %v784, 0.0
          %v819 = vmax.f32 %v789, 0.0
          %v820 = vmax.f32 %v794, 0.0
          %v821 = vmax.f32 %v799, 0.0
          %v822 = vmax.f32 %v804, 0.0
          %839 = vrot.lane.b32.xlu0 %v807, 16
          %v840 = vpop.permute.xlu0 %839
          %841 = vrot.lane.b32.xlu0 %v808, 16
          %v842 = vpop.permute.xlu0 %841
          %843 = vrot.lane.b32.xlu0 %v809, 16
          %v844 = vpop.permute.xlu0 %843
          %845 = vrot.lane.b32.xlu0 %v810, 16
          %v846 = vpop.permute.xlu0 %845
          %847 = vrot.lane.b32.xlu0 %v811, 16
          %v848 = vpop.permute.xlu0 %847
          %849 = vrot.lane.b32.xlu0 %v812, 16
          %v850 = vpop.permute.xlu0 %849
          %851 = vrot.lane.b32.xlu0 %v813, 16
          %v852 = vpop.permute.xlu0 %851
          %853 = vrot.lane.b32.xlu0 %v814, 16
          %v854 = vpop.permute.xlu0 %853
          %855 = vrot.lane.b32.xlu0 %v815, 16
          %v856 = vpop.permute.xlu0 %855
          %857 = vrot.lane.b32.xlu0 %v816, 16
          %v858 = vpop.permute.xlu0 %857
          %859 = vrot.lane.b32.xlu0 %v817, 16
          %v860 = vpop.permute.xlu0 %859
          %861 = vrot.lane.b32.xlu0 %v818, 16
          %v862 = vpop.permute.xlu0 %861
          %863 = vrot.lane.b32.xlu0 %v819, 16
          %v864 = vpop.permute.xlu0 %863
          %865 = vrot.lane.b32.xlu0 %v820, 16
          %v866 = vpop.permute.xlu0 %865
          %867 = vrot.lane.b32.xlu0 %v821, 16
          %v868 = vpop.permute.xlu0 %867
          %869 = vrot.lane.b32.xlu0 %v822, 16
          %v870 = vpop.permute.xlu0 %869
          %887 = vrot.lane.b32.xlu0 %v807, 32
          %v888 = vpop.permute.xlu0 %887
          %889 = vrot.lane.b32.xlu0 %v808, 32
          %v890 = vpop.permute.xlu0 %889
          %891 = vrot.lane.b32.xlu0 %v809, 32
          %v892 = vpop.permute.xlu0 %891
          %893 = vrot.lane.b32.xlu0 %v810, 32
          %v894 = vpop.permute.xlu0 %893
          %895 = vrot.lane.b32.xlu0 %v811, 32
          %v896 = vpop.permute.xlu0 %895
          %897 = vrot.lane.b32.xlu0 %v812, 32
          %v898 = vpop.permute.xlu0 %897
          %899 = vrot.lane.b32.xlu0 %v813, 32
          %v900 = vpop.permute.xlu0 %899
          %901 = vrot.lane.b32.xlu0 %v814, 32
          %v902 = vpop.permute.xlu0 %901
          %903 = vrot.lane.b32.xlu0 %v815, 32
          %v904 = vpop.permute.xlu0 %903
          %905 = vrot.lane.b32.xlu0 %v816, 32
          %v906 = vpop.permute.xlu0 %905
          %907 = vrot.lane.b32.xlu0 %v817, 32
          %v908 = vpop.permute.xlu0 %907
          %909 = vrot.lane.b32.xlu0 %v818, 32
          %v910 = vpop.permute.xlu0 %909
          %911 = vrot.lane.b32.xlu0 %v819, 32
          %v912 = vpop.permute.xlu0 %911
          %913 = vrot.lane.b32.xlu0 %v820, 32
          %v914 = vpop.permute.xlu0 %913
          %915 = vrot.lane.b32.xlu0 %v821, 32
          %v916 = vpop.permute.xlu0 %915
          %917 = vrot.lane.b32.xlu0 %v822, 32
          %v918 = vpop.permute.xlu0 %917
          %vm935 = vcmask 130048
          %v936 = vsel %vm935, %v807, %v840
          %v937 = vsel %vm935, %v808, %v842
          %v938 = vsel %vm935, %v809, %v844
          %v939 = vsel %vm935, %v810, %v846
          %v940 = vsel %vm935, %v811, %v848
          %v941 = vsel %vm935, %v812, %v850
          %v942 = vsel %vm935, %v813, %v852
          %v943 = vsel %vm935, %v814, %v854
          %v944 = vsel %vm935, %v815, %v856
          %v945 = vsel %vm935, %v816, %v858
          %v946 = vsel %vm935, %v817, %v860
          %v947 = vsel %vm935, %v818, %v862
          %v948 = vsel %vm935, %v819, %v864
          %v949 = vsel %vm935, %v820, %v866
          %v950 = vsel %vm935, %v821, %v868
          %v951 = vsel %vm935, %v822, %v870
          %vm952 = vcmask 261120
          %v953 = vsel %vm952, %v936, %v888
          %v954 = vsel %vm952, %v937, %v890
          %v955 = vsel %vm952, %v938, %v892
          %v956 = vsel %vm952, %v939, %v894
          %v957 = vsel %vm952, %v940, %v896
          %v958 = vsel %vm952, %v941, %v898
          %v959 = vsel %vm952, %v942, %v900
          %v960 = vsel %vm952, %v943, %v902
          %v961 = vsel %vm952, %v944, %v904
          %v962 = vsel %vm952, %v945, %v906
          %v963 = vsel %vm952, %v946, %v908
          %v964 = vsel %vm952, %v947, %v910
          %v965 = vsel %vm952, %v948, %v912
          %v966 = vsel %vm952, %v949, %v914
          %v967 = vsel %vm952, %v950, %v916
          %v968 = vsel %vm952, %v951, %v918
          %v969 = vmul.f32 %v953, 0.5
          %v970 = vmul.f32 %v954, 0.5
          %v971 = vmul.f32 %v955, 0.5
          %v972 = vmul.f32 %v956, 0.5
          %v973 = vmul.f32 %v957, 0.5
          %v974 = vmul.f32 %v958, 0.5
          %v975 = vmul.f32 %v959, 0.5
          %v976 = vmul.f32 %v960, 0.5
          %v977 = vmul.f32 %v961, 0.5
          %v978 = vmul.f32 %v962, 0.5
          %v979 = vmul.f32 %v963, 0.5
          %v980 = vmul.f32 %v964, 0.5
          %v981 = vmul.f32 %v965, 0.5
          %v982 = vmul.f32 %v966, 0.5
          %v983 = vmul.f32 %v967, 0.5
          %v984 = vmul.f32 %v968, 0.5
          %s985 = scalar_lea.vmem [#allocation4], %s406
          %vm986 = vcmask 392192
          %987 = vst.msk [vmem:[%s985] sm:$0xff] %vm986, %v969
          %988 = vst.msk [vmem:[%s985 + $0x8] sm:$0xff] %vm986, %v970
          %989 = vst.msk [vmem:[%s985 + $0x10] sm:$0xff] %vm986, %v971
          %990 = vst.msk [vmem:[%s985 + $0x18] sm:$0xff] %vm986, %v972
          %991 = vst.msk [vmem:[%s985 + $0x20] sm:$0xff] %vm986, %v973
          %992 = vst.msk [vmem:[%s985 + $0x28] sm:$0xff] %vm986, %v974
          %993 = vst.msk [vmem:[%s985 + $0x30] sm:$0xff] %vm986, %v975
          %994 = vst.msk [vmem:[%s985 + $0x38] sm:$0xff] %vm986, %v976
          %995 = vst.msk [vmem:[%s985 + $0x40] sm:$0xff] %vm986, %v977
          %996 = vst.msk [vmem:[%s985 + $0x48] sm:$0xff] %vm986, %v978
          %997 = vst.msk [vmem:[%s985 + $0x50] sm:$0xff] %vm986, %v979
          %998 = vst.msk [vmem:[%s985 + $0x58] sm:$0xff] %vm986, %v980
          %999 = vst.msk [vmem:[%s985 + $0x60] sm:$0xff] %vm986, %v981
          %1000 = vst.msk [vmem:[%s985 + $0x68] sm:$0xff] %vm986, %v982
          %1001 = vst.msk [vmem:[%s985 + $0x70] sm:$0xff] %vm986, %v983
          %1002 = vst.msk [vmem:[%s985 + $0x78] sm:$0xff] %vm986, %v984
          %v1003 = vld [vmem:[%s385] sm:$0xff]
          %v1004 = vld [vmem:[%s385 + $0x8] sm:$0xff]
          %v1005 = vld [vmem:[%s385 + $0x10] sm:$0xff]
          %v1006 = vld [vmem:[%s385 + $0x18] sm:$0xff]
          %v1007 = vld [vmem:[%s385 + $0x20] sm:$0xff]
          %v1008 = vld [vmem:[%s385 + $0x28] sm:$0xff]
          %v1009 = vld [vmem:[%s385 + $0x30] sm:$0xff]
          %v1010 = vld [vmem:[%s385 + $0x38] sm:$0xff]
          %v1011 = vld [vmem:[%s385 + $0x40] sm:$0xff]
          %v1012 = vld [vmem:[%s385 + $0x48] sm:$0xff]
          %v1013 = vld [vmem:[%s385 + $0x50] sm:$0xff]
          %v1014 = vld [vmem:[%s385 + $0x58] sm:$0xff]
          %v1015 = vld [vmem:[%s385 + $0x60] sm:$0xff]
          %v1016 = vld [vmem:[%s385 + $0x68] sm:$0xff]
          %v1017 = vld [vmem:[%s385 + $0x70] sm:$0xff]
          %v1018 = vld [vmem:[%s385 + $0x78] sm:$0xff]
          %s1019 = scalar_lea.vmem [#allocation2], %s406
          %1020 = vst.msk [vmem:[%s1019] sm:$0xff] %vm986, %v1003
          %1021 = vst.msk [vmem:[%s1019 + $0x8] sm:$0xff] %vm986, %v1004
          %1022 = vst.msk [vmem:[%s1019 + $0x10] sm:$0xff] %vm986, %v1005
          %1023 = vst.msk [vmem:[%s1019 + $0x18] sm:$0xff] %vm986, %v1006
          %1024 = vst.msk [vmem:[%s1019 + $0x20] sm:$0xff] %vm986, %v1007
          %1025 = vst.msk [vmem:[%s1019 + $0x28] sm:$0xff] %vm986, %v1008
          %1026 = vst.msk [vmem:[%s1019 + $0x30] sm:$0xff] %vm986, %v1009
          %1027 = vst.msk [vmem:[%s1019 + $0x38] sm:$0xff] %vm986, %v1010
          %1028 = vst.msk [vmem:[%s1019 + $0x40] sm:$0xff] %vm986, %v1011
          %1029 = vst.msk [vmem:[%s1019 + $0x48] sm:$0xff] %vm986, %v1012
          %1030 = vst.msk [vmem:[%s1019 + $0x50] sm:$0xff] %vm986, %v1013
          %1031 = vst.msk [vmem:[%s1019 + $0x58] sm:$0xff] %vm986, %v1014
          %1032 = vst.msk [vmem:[%s1019 + $0x60] sm:$0xff] %vm986, %v1015
          %1033 = vst.msk [vmem:[%s1019 + $0x68] sm:$0xff] %vm986, %v1016
          %1034 = vst.msk [vmem:[%s1019 + $0x70] sm:$0xff] %vm986, %v1017
          %1035 = vst.msk [vmem:[%s1019 + $0x78] sm:$0xff] %vm986, %v1018
        $region60: #{tpu_custom_call.1} parent=51 // pred_fallthru
          _
        %p1036 = scmp.gt.s32.totalorder %s25, 0
        // Predicated region
        $region61: #{tpu_custom_call.1} parent=51 // pred_check
          %p1037 = pneg %p1036
        $region62: #{tpu_custom_call.1} parent=51 // pred_check_branch
          %1039 = sbr.rel (%p1037) target = $region64
        $region63: #{tpu_custom_call.1} parent=51 // pred_region
          %p1040 = scmp.eq.s32.totalorder %s26, 0
          // Predicated region
          $region65: #{tpu_custom_call.1} parent=63 // pred_check
            %p1041 = pneg %p1040
          $region66: #{tpu_custom_call.1} parent=63 // pred_check_branch
            %1043 = sbr.rel (%p1041) target = $region68
          $region67: #{tpu_custom_call.1} parent=63 // pred_region
            %v1044 = vld [vmem:[#allocation5] sm:$0xff]
            %v1045 = vld [vmem:[#allocation5 + $0x8] sm:$0xff]
            %v1046 = vld [vmem:[#allocation5 + $0x10] sm:$0xff]
            %v1047 = vld [vmem:[#allocation5 + $0x18] sm:$0xff]
            %v1048 = vld [vmem:[#allocation5 + $0x20] sm:$0xff]
            %v1049 = vld [vmem:[#allocation5 + $0x28] sm:$0xff]
            %v1050 = vld [vmem:[#allocation5 + $0x30] sm:$0xff]
            %v1051 = vld [vmem:[#allocation5 + $0x38] sm:$0xff]
            %v1052 = vld [vmem:[#allocation5 + $0x40] sm:$0xff]
            %v1053 = vld [vmem:[#allocation5 + $0x48] sm:$0xff]
            %v1054 = vld [vmem:[#allocation5 + $0x50] sm:$0xff]
            %v1055 = vld [vmem:[#allocation5 + $0x58] sm:$0xff]
            %v1056 = vld [vmem:[#allocation5 + $0x60] sm:$0xff]
            %v1057 = vld [vmem:[#allocation5 + $0x68] sm:$0xff]
            %v1058 = vld [vmem:[#allocation5 + $0x70] sm:$0xff]
            %v1059 = vld [vmem:[#allocation5 + $0x78] sm:$0xff]
            %v1060 = vld [vmem:[#allocation5 + $0x80] sm:$0xff]
            %v1061 = vld [vmem:[#allocation5 + $0x88] sm:$0xff]
            %v1062 = vld [vmem:[#allocation5 + $0x90] sm:$0xff]
            %v1063 = vld [vmem:[#allocation5 + $0x98] sm:$0xff]
            %v1064 = vld [vmem:[#allocation5 + $0xa0] sm:$0xff]
            %v1065 = vld [vmem:[#allocation5 + $0xa8] sm:$0xff]
            %v1066 = vld [vmem:[#allocation5 + $0xb0] sm:$0xff]
            %v1067 = vld [vmem:[#allocation5 + $0xb8] sm:$0xff]
            %v1068 = vld [vmem:[#allocation5 + $0xc0] sm:$0xff]
            %v1069 = vld [vmem:[#allocation5 + $0xc8] sm:$0xff]
            %v1070 = vld [vmem:[#allocation5 + $0xd0] sm:$0xff]
            %v1071 = vld [vmem:[#allocation5 + $0xd8] sm:$0xff]
            %v1072 = vld [vmem:[#allocation5 + $0xe0] sm:$0xff]
            %v1073 = vld [vmem:[#allocation5 + $0xe8] sm:$0xff]
            %v1074 = vld [vmem:[#allocation5 + $0xf0] sm:$0xff]
            %v1075 = vld [vmem:[#allocation5 + $0xf8] sm:$0xff]
            %v1076 = vld [vmem:[#allocation2] sm:$0xff]
            %v1077 = vld [vmem:[#allocation2 + $0x8] sm:$0xff]
            %v1078 = vld [vmem:[#allocation2 + $0x10] sm:$0xff]
            %v1079 = vld [vmem:[#allocation2 + $0x18] sm:$0xff]
            %v1080 = vld [vmem:[#allocation2 + $0x20] sm:$0xff]
            %v1081 = vld [vmem:[#allocation2 + $0x28] sm:$0xff]
            %v1082 = vld [vmem:[#allocation2 + $0x30] sm:$0xff]
            %v1083 = vld [vmem:[#allocation2 + $0x38] sm:$0xff]
            %v1084 = vld [vmem:[#allocation2 + $0x40] sm:$0xff]
            %v1085 = vld [vmem:[#allocation2 + $0x48] sm:$0xff]
            %v1086 = vld [vmem:[#allocation2 + $0x50] sm:$0xff]
            %v1087 = vld [vmem:[#allocation2 + $0x58] sm:$0xff]
            %v1088 = vld [vmem:[#allocation2 + $0x60] sm:$0xff]
            %v1089 = vld [vmem:[#allocation2 + $0x68] sm:$0xff]
            %v1090 = vld [vmem:[#allocation2 + $0x70] sm:$0xff]
            %v1091 = vld [vmem:[#allocation2 + $0x78] sm:$0xff]
            %v1092 = vld [vmem:[#allocation2 + $0x80] sm:$0xff]
            %v1093 = vld [vmem:[#allocation2 + $0x88] sm:$0xff]
            %v1094 = vld [vmem:[#allocation2 + $0x90] sm:$0xff]
            %v1095 = vld [vmem:[#allocation2 + $0x98] sm:$0xff]
            %v1096 = vld [vmem:[#allocation2 + $0xa0] sm:$0xff]
            %v1097 = vld [vmem:[#allocation2 + $0xa8] sm:$0xff]
            %v1098 = vld [vmem:[#allocation2 + $0xb0] sm:$0xff]
            %v1099 = vld [vmem:[#allocation2 + $0xb8] sm:$0xff]
            %v1100 = vld [vmem:[#allocation2 + $0xc0] sm:$0xff]
            %v1101 = vld [vmem:[#allocation2 + $0xc8] sm:$0xff]
            %v1102 = vld [vmem:[#allocation2 + $0xd0] sm:$0xff]
            %v1103 = vld [vmem:[#allocation2 + $0xd8] sm:$0xff]
            %v1104 = vld [vmem:[#allocation2 + $0xe0] sm:$0xff]
            %v1105 = vld [vmem:[#allocation2 + $0xe8] sm:$0xff]
            %v1106 = vld [vmem:[#allocation2 + $0xf0] sm:$0xff]
            %v1107 = vld [vmem:[#allocation2 + $0xf8] sm:$0xff]
            %1109 = vset.pattern.permute.xlu0 0
            %1110 = vperm.xlu0 %1109, %v1044
            %v1111 = vpop.permute.xlu0 %1110
            %1114 = vset.pattern.permute.xlu0 0
            %1115 = vperm.xlu0 %1114, %v1045
            %v1116 = vpop.permute.xlu0 %1115
            %1119 = vset.pattern.permute.xlu0 0
            %1120 = vperm.xlu0 %1119, %v1046
            %v1121 = vpop.permute.xlu0 %1120
            %1124 = vset.pattern.permute.xlu0 0
            %1125 = vperm.xlu0 %1124, %v1047
            %v1126 = vpop.permute.xlu0 %1125
            %1129 = vset.pattern.permute.xlu0 0
            %1130 = vperm.xlu0 %1129, %v1048
            %v1131 = vpop.permute.xlu0 %1130
            %1134 = vset.pattern.permute.xlu0 0
            %1135 = vperm.xlu0 %1134, %v1049
            %v1136 = vpop.permute.xlu0 %1135
            %1139 = vset.pattern.permute.xlu0 0
            %1140 = vperm.xlu0 %1139, %v1050
            %v1141 = vpop.permute.xlu0 %1140
            %1144 = vset.pattern.permute.xlu0 0
            %1145 = vperm.xlu0 %1144, %v1051
            %v1146 = vpop.permute.xlu0 %1145
            %1149 = vset.pattern.permute.xlu0 0
            %1150 = vperm.xlu0 %1149, %v1052
            %v1151 = vpop.permute.xlu0 %1150
            %1154 = vset.pattern.permute.xlu0 0
            %1155 = vperm.xlu0 %1154, %v1053
            %v1156 = vpop.permute.xlu0 %1155
            %1159 = vset.pattern.permute.xlu0 0
            %1160 = vperm.xlu0 %1159, %v1054
            %v1161 = vpop.permute.xlu0 %1160
            %1164 = vset.pattern.permute.xlu0 0
            %1165 = vperm.xlu0 %1164, %v1055
            %v1166 = vpop.permute.xlu0 %1165
            %1169 = vset.pattern.permute.xlu0 0
            %1170 = vperm.xlu0 %1169, %v1056
            %v1171 = vpop.permute.xlu0 %1170
            %1174 = vset.pattern.permute.xlu0 0
            %1175 = vperm.xlu0 %1174, %v1057
            %v1176 = vpop.permute.xlu0 %1175
            %1179 = vset.pattern.permute.xlu0 0
            %1180 = vperm.xlu0 %1179, %v1058
            %v1181 = vpop.permute.xlu0 %1180
            %1184 = vset.pattern.permute.xlu0 0
            %1185 = vperm.xlu0 %1184, %v1059
            %v1186 = vpop.permute.xlu0 %1185
            %1189 = vset.pattern.permute.xlu0 0
            %1190 = vperm.xlu0 %1189, %v1060
            %v1191 = vpop.permute.xlu0 %1190
            %1194 = vset.pattern.permute.xlu0 0
            %1195 = vperm.xlu0 %1194, %v1061
            %v1196 = vpop.permute.xlu0 %1195
            %1199 = vset.pattern.permute.xlu0 0
            %1200 = vperm.xlu0 %1199, %v1062
            %v1201 = vpop.permute.xlu0 %1200
            %1204 = vset.pattern.permute.xlu0 0
            %1205 = vperm.xlu0 %1204, %v1063
            %v1206 = vpop.permute.xlu0 %1205
            %1209 = vset.pattern.permute.xlu0 0
            %1210 = vperm.xlu0 %1209, %v1064
            %v1211 = vpop.permute.xlu0 %1210
            %1214 = vset.pattern.permute.xlu0 0
            %1215 = vperm.xlu0 %1214, %v1065
            %v1216 = vpop.permute.xlu0 %1215
            %1219 = vset.pattern.permute.xlu0 0
            %1220 = vperm.xlu0 %1219, %v1066
            %v1221 = vpop.permute.xlu0 %1220
            %1224 = vset.pattern.permute.xlu0 0
            %1225 = vperm.xlu0 %1224, %v1067
            %v1226 = vpop.permute.xlu0 %1225
            %1229 = vset.pattern.permute.xlu0 0
            %1230 = vperm.xlu0 %1229, %v1068
            %v1231 = vpop.permute.xlu0 %1230
            %1234 = vset.pattern.permute.xlu0 0
            %1235 = vperm.xlu0 %1234, %v1069
            %v1236 = vpop.permute.xlu0 %1235
            %1239 = vset.pattern.permute.xlu0 0
            %1240 = vperm.xlu0 %1239, %v1070
            %v1241 = vpop.permute.xlu0 %1240
            %1244 = vset.pattern.permute.xlu0 0
            %1245 = vperm.xlu0 %1244, %v1071
            %v1246 = vpop.permute.xlu0 %1245
            %1249 = vset.pattern.permute.xlu0 0
            %1250 = vperm.xlu0 %1249, %v1072
            %v1251 = vpop.permute.xlu0 %1250
            %1254 = vset.pattern.permute.xlu0 0
            %1255 = vperm.xlu0 %1254, %v1073
            %v1256 = vpop.permute.xlu0 %1255
            %1259 = vset.pattern.permute.xlu0 0
            %1260 = vperm.xlu0 %1259, %v1074
            %v1261 = vpop.permute.xlu0 %1260
            %1264 = vset.pattern.permute.xlu0 0
            %1265 = vperm.xlu0 %1264, %v1075
            %v1266 = vpop.permute.xlu0 %1265
            %v1268 = vmul.f32 %v1111, %v1076
            %v1269 = vmul.f32 %v1116, %v1077
            %v1270 = vmul.f32 %v1121, %v1078
            %v1271 = vmul.f32 %v1126, %v1079
            %v1272 = vmul.f32 %v1131, %v1080
            %v1273 = vmul.f32 %v1136, %v1081
            %v1274 = vmul.f32 %v1141, %v1082
            %v1275 = vmul.f32 %v1146, %v1083
            %v1276 = vmul.f32 %v1151, %v1084
            %v1277 = vmul.f32 %v1156, %v1085
            %v1278 = vmul.f32 %v1161, %v1086
            %v1279 = vmul.f32 %v1166, %v1087
            %v1280 = vmul.f32 %v1171, %v1088
            %v1281 = vmul.f32 %v1176, %v1089
            %v1282 = vmul.f32 %v1181, %v1090
            %v1283 = vmul.f32 %v1186, %v1091
            %v1284 = vmul.f32 %v1191, %v1092
            %v1285 = vmul.f32 %v1196, %v1093
            %v1286 = vmul.f32 %v1201, %v1094
            %v1287 = vmul.f32 %v1206, %v1095
            %v1288 = vmul.f32 %v1211, %v1096
            %v1289 = vmul.f32 %v1216, %v1097
            %v1290 = vmul.f32 %v1221, %v1098
            %v1291 = vmul.f32 %v1226, %v1099
            %v1292 = vmul.f32 %v1231, %v1100
            %v1293 = vmul.f32 %v1236, %v1101
            %v1294 = vmul.f32 %v1241, %v1102
            %v1295 = vmul.f32 %v1246, %v1103
            %v1296 = vmul.f32 %v1251, %v1104
            %v1297 = vmul.f32 %v1256, %v1105
            %v1298 = vmul.f32 %v1261, %v1106
            %v1299 = vmul.f32 %v1266, %v1107
            %v1300 = vpack.c.bf16 %v1269, %v1268
            %v1301 = vpack.c.bf16 %v1271, %v1270
            %v1302 = vpack.c.bf16 %v1273, %v1272
            %v1303 = vpack.c.bf16 %v1275, %v1274
            %v1304 = vpack.c.bf16 %v1277, %v1276
            %v1305 = vpack.c.bf16 %v1279, %v1278
            %v1306 = vpack.c.bf16 %v1281, %v1280
            %v1307 = vpack.c.bf16 %v1283, %v1282
            %v1308 = vpack.c.bf16 %v1285, %v1284
            %v1309 = vpack.c.bf16 %v1287, %v1286
            %v1310 = vpack.c.bf16 %v1289, %v1288
            %v1311 = vpack.c.bf16 %v1291, %v1290
            %v1312 = vpack.c.bf16 %v1293, %v1292
            %v1313 = vpack.c.bf16 %v1295, %v1294
            %v1314 = vpack.c.bf16 %v1297, %v1296
            %v1315 = vpack.c.bf16 %v1299, %v1298
            %v1332 = vunpack.c.l.b16 %v1300
            %v1333 = vunpack.c.h.b16 %v1300
            %v1334 = vunpack.c.l.b16 %v1301
            %v1335 = vunpack.c.h.b16 %v1301
            %v1336 = vunpack.c.l.b16 %v1302
            %v1337 = vunpack.c.h.b16 %v1302
            %v1338 = vunpack.c.l.b16 %v1303
            %v1339 = vunpack.c.h.b16 %v1303
            %v1340 = vunpack.c.l.b16 %v1304
            %v1341 = vunpack.c.h.b16 %v1304
            %v1342 = vunpack.c.l.b16 %v1305
            %v1343 = vunpack.c.h.b16 %v1305
            %v1344 = vunpack.c.l.b16 %v1306
            %v1345 = vunpack.c.h.b16 %v1306
            %v1346 = vunpack.c.l.b16 %v1307
            %v1347 = vunpack.c.h.b16 %v1307
            %v1348 = vunpack.c.l.b16 %v1308
            %v1349 = vunpack.c.h.b16 %v1308
            %v1350 = vunpack.c.l.b16 %v1309
            %v1351 = vunpack.c.h.b16 %v1309
            %v1352 = vunpack.c.l.b16 %v1310
            %v1353 = vunpack.c.h.b16 %v1310
            %v1354 = vunpack.c.l.b16 %v1311
            %v1355 = vunpack.c.h.b16 %v1311
            %v1356 = vunpack.c.l.b16 %v1312
            %v1357 = vunpack.c.h.b16 %v1312
            %v1358 = vunpack.c.l.b16 %v1313
            %v1359 = vunpack.c.h.b16 %v1313
            %v1360 = vunpack.c.l.b16 %v1314
            %v1361 = vunpack.c.h.b16 %v1314
            %v1362 = vunpack.c.l.b16 %v1315
            %v1363 = vunpack.c.h.b16 %v1315
            %v1364 = vpack.c.b16 %v1332, %v1332
            %v1365 = vpack.c.b16 %v1333, %v1333
            %v1366 = vpack.c.b16 %v1334, %v1334
            %v1367 = vpack.c.b16 %v1335, %v1335
            %v1368 = vpack.c.b16 %v1336, %v1336
            %v1369 = vpack.c.b16 %v1337, %v1337
            %v1370 = vpack.c.b16 %v1338, %v1338
            %v1371 = vpack.c.b16 %v1339, %v1339
            %v1372 = vpack.c.b16 %v1340, %v1340
            %v1373 = vpack.c.b16 %v1341, %v1341
            %v1374 = vpack.c.b16 %v1342, %v1342
            %v1375 = vpack.c.b16 %v1343, %v1343
            %v1376 = vpack.c.b16 %v1344, %v1344
            %v1377 = vpack.c.b16 %v1345, %v1345
            %v1378 = vpack.c.b16 %v1346, %v1346
            %v1379 = vpack.c.b16 %v1347, %v1347
            %v1380 = vpack.c.b16 %v1348, %v1348
            %v1381 = vpack.c.b16 %v1349, %v1349
            %v1382 = vpack.c.b16 %v1350, %v1350
            %v1383 = vpack.c.b16 %v1351, %v1351
            %v1384 = vpack.c.b16 %v1352, %v1352
            %v1385 = vpack.c.b16 %v1353, %v1353
            %v1386 = vpack.c.b16 %v1354, %v1354
            %v1387 = vpack.c.b16 %v1355, %v1355
            %v1388 = vpack.c.b16 %v1356, %v1356
            %v1389 = vpack.c.b16 %v1357, %v1357
            %v1390 = vpack.c.b16 %v1358, %v1358
            %v1391 = vpack.c.b16 %v1359, %v1359
            %v1392 = vpack.c.b16 %v1360, %v1360
            %v1393 = vpack.c.b16 %v1361, %v1361
            %v1394 = vpack.c.b16 %v1362, %v1362
            %v1395 = vpack.c.b16 %v1363, %v1363
            %vm1428 = vcmask 388096
            %1429 = vst.msk [vmem:[#allocation3] sm:$0xf] %vm1428, %v1364
            %1430 = vst.msk [vmem:[#allocation3 + $0x4] sm:$0xf] %vm1428, %v1365
            %1431 = vst.msk [vmem:[#allocation3 + $0x8] sm:$0xf] %vm1428, %v1366
            %1432 = vst.msk [vmem:[#allocation3 + $0xc] sm:$0xf] %vm1428, %v1367
            %1433 = vst.msk [vmem:[#allocation3 + $0x10] sm:$0xf] %vm1428, %v1368
            %1434 = vst.msk [vmem:[#allocation3 + $0x14] sm:$0xf] %vm1428, %v1369
            %1435 = vst.msk [vmem:[#allocation3 + $0x18] sm:$0xf] %vm1428, %v1370
            %1436 = vst.msk [vmem:[#allocation3 + $0x1c] sm:$0xf] %vm1428, %v1371
            %1437 = vst.msk [vmem:[#allocation3 + $0x20] sm:$0xf] %vm1428, %v1372
            %1438 = vst.msk [vmem:[#allocation3 + $0x24] sm:$0xf] %vm1428, %v1373
            %1439 = vst.msk [vmem:[#allocation3 + $0x28] sm:$0xf] %vm1428, %v1374
            %1440 = vst.msk [vmem:[#allocation3 + $0x2c] sm:$0xf] %vm1428, %v1375
            %1441 = vst.msk [vmem:[#allocation3 + $0x30] sm:$0xf] %vm1428, %v1376
            %1442 = vst.msk [vmem:[#allocation3 + $0x34] sm:$0xf] %vm1428, %v1377
            %1443 = vst.msk [vmem:[#allocation3 + $0x38] sm:$0xf] %vm1428, %v1378
            %1444 = vst.msk [vmem:[#allocation3 + $0x3c] sm:$0xf] %vm1428, %v1379
            %1445 = vst.msk [vmem:[#allocation3 + $0x40] sm:$0xf] %vm1428, %v1380
            %1446 = vst.msk [vmem:[#allocation3 + $0x44] sm:$0xf] %vm1428, %v1381
            %1447 = vst.msk [vmem:[#allocation3 + $0x48] sm:$0xf] %vm1428, %v1382
            %1448 = vst.msk [vmem:[#allocation3 + $0x4c] sm:$0xf] %vm1428, %v1383
            %1449 = vst.msk [vmem:[#allocation3 + $0x50] sm:$0xf] %vm1428, %v1384
            %1450 = vst.msk [vmem:[#allocation3 + $0x54] sm:$0xf] %vm1428, %v1385
            %1451 = vst.msk [vmem:[#allocation3 + $0x58] sm:$0xf] %vm1428, %v1386
            %1452 = vst.msk [vmem:[#allocation3 + $0x5c] sm:$0xf] %vm1428, %v1387
            %1453 = vst.msk [vmem:[#allocation3 + $0x60] sm:$0xf] %vm1428, %v1388
            %1454 = vst.msk [vmem:[#allocation3 + $0x64] sm:$0xf] %vm1428, %v1389
            %1455 = vst.msk [vmem:[#allocation3 + $0x68] sm:$0xf] %vm1428, %v1390
            %1456 = vst.msk [vmem:[#allocation3 + $0x6c] sm:$0xf] %vm1428, %v1391
            %1457 = vst.msk [vmem:[#allocation3 + $0x70] sm:$0xf] %vm1428, %v1392
            %1458 = vst.msk [vmem:[#allocation3 + $0x74] sm:$0xf] %vm1428, %v1393
            %1459 = vst.msk [vmem:[#allocation3 + $0x78] sm:$0xf] %vm1428, %v1394
            %1460 = vst.msk [vmem:[#allocation3 + $0x7c] sm:$0xf] %vm1428, %v1395
          $region68: #{tpu_custom_call.1} parent=63 // pred_fallthru
            _
          %s1461 = scalar_lea.vmem [#allocation5], %s406
          %v1462 = vld [vmem:[%s1461] sm:$0xff]
          %v1463 = vld [vmem:[%s1461 + $0x8] sm:$0xff]
          %v1464 = vld [vmem:[%s1461 + $0x10] sm:$0xff]
          %v1465 = vld [vmem:[%s1461 + $0x18] sm:$0xff]
          %v1466 = vld [vmem:[%s1461 + $0x20] sm:$0xff]
          %v1467 = vld [vmem:[%s1461 + $0x28] sm:$0xff]
          %v1468 = vld [vmem:[%s1461 + $0x30] sm:$0xff]
          %v1469 = vld [vmem:[%s1461 + $0x38] sm:$0xff]
          %v1470 = vld [vmem:[%s1461 + $0x40] sm:$0xff]
          %v1471 = vld [vmem:[%s1461 + $0x48] sm:$0xff]
          %v1472 = vld [vmem:[%s1461 + $0x50] sm:$0xff]
          %v1473 = vld [vmem:[%s1461 + $0x58] sm:$0xff]
          %v1474 = vld [vmem:[%s1461 + $0x60] sm:$0xff]
          %v1475 = vld [vmem:[%s1461 + $0x68] sm:$0xff]
          %v1476 = vld [vmem:[%s1461 + $0x70] sm:$0xff]
          %v1477 = vld [vmem:[%s1461 + $0x78] sm:$0xff]
          %v1478 = vld [vmem:[%s379] sm:$0xff]
          %v1479 = vld [vmem:[%s379 + $0x8] sm:$0xff]
          %v1480 = vld [vmem:[%s379 + $0x10] sm:$0xff]
          %v1481 = vld [vmem:[%s379 + $0x18] sm:$0xff]
          %v1482 = vld [vmem:[%s379 + $0x20] sm:$0xff]
          %v1483 = vld [vmem:[%s379 + $0x28] sm:$0xff]
          %v1484 = vld [vmem:[%s379 + $0x30] sm:$0xff]
          %v1485 = vld [vmem:[%s379 + $0x38] sm:$0xff]
          %v1486 = vld [vmem:[%s379 + $0x40] sm:$0xff]
          %v1487 = vld [vmem:[%s379 + $0x48] sm:$0xff]
          %v1488 = vld [vmem:[%s379 + $0x50] sm:$0xff]
          %v1489 = vld [vmem:[%s379 + $0x58] sm:$0xff]
          %v1490 = vld [vmem:[%s379 + $0x60] sm:$0xff]
          %v1491 = vld [vmem:[%s379 + $0x68] sm:$0xff]
          %v1492 = vld [vmem:[%s379 + $0x70] sm:$0xff]
          %v1493 = vld [vmem:[%s379 + $0x78] sm:$0xff]
          %v1494 = vld [vmem:[#allocation3] sm:$0xf]
          %v1495 = vld [vmem:[#allocation3 + $0x4] sm:$0xf]
          %v1496 = vld [vmem:[#allocation3 + $0x8] sm:$0xf]
          %v1497 = vld [vmem:[#allocation3 + $0xc] sm:$0xf]
          %v1498 = vld [vmem:[#allocation3 + $0x10] sm:$0xf]
          %v1499 = vld [vmem:[#allocation3 + $0x14] sm:$0xf]
          %v1500 = vld [vmem:[#allocation3 + $0x18] sm:$0xf]
          %v1501 = vld [vmem:[#allocation3 + $0x1c] sm:$0xf]
          %v1502 = vld [vmem:[#allocation3 + $0x20] sm:$0xf]
          %v1503 = vld [vmem:[#allocation3 + $0x24] sm:$0xf]
          %v1504 = vld [vmem:[#allocation3 + $0x28] sm:$0xf]
          %v1505 = vld [vmem:[#allocation3 + $0x2c] sm:$0xf]
          %v1506 = vld [vmem:[#allocation3 + $0x30] sm:$0xf]
          %v1507 = vld [vmem:[#allocation3 + $0x34] sm:$0xf]
          %v1508 = vld [vmem:[#allocation3 + $0x38] sm:$0xf]
          %v1509 = vld [vmem:[#allocation3 + $0x3c] sm:$0xf]
          %v1510 = vld [vmem:[#allocation3 + $0x40] sm:$0xf]
          %v1511 = vld [vmem:[#allocation3 + $0x44] sm:$0xf]
          %v1512 = vld [vmem:[#allocation3 + $0x48] sm:$0xf]
          %v1513 = vld [vmem:[#allocation3 + $0x4c] sm:$0xf]
          %v1514 = vld [vmem:[#allocation3 + $0x50] sm:$0xf]
          %v1515 = vld [vmem:[#allocation3 + $0x54] sm:$0xf]
          %v1516 = vld [vmem:[#allocation3 + $0x58] sm:$0xf]
          %v1517 = vld [vmem:[#allocation3 + $0x5c] sm:$0xf]
          %v1518 = vld [vmem:[#allocation3 + $0x60] sm:$0xf]
          %v1519 = vld [vmem:[#allocation3 + $0x64] sm:$0xf]
          %v1520 = vld [vmem:[#allocation3 + $0x68] sm:$0xf]
          %v1521 = vld [vmem:[#allocation3 + $0x6c] sm:$0xf]
          %v1522 = vld [vmem:[#allocation3 + $0x70] sm:$0xf]
          %v1523 = vld [vmem:[#allocation3 + $0x74] sm:$0xf]
          %v1524 = vld [vmem:[#allocation3 + $0x78] sm:$0xf]
          %v1525 = vld [vmem:[#allocation3 + $0x7c] sm:$0xf]
          %s1526 = sshra.s32 %s406, 3
          %s1527 = sand.u32 %s406, 7
          %s1528 = smul.addr %s1526, 4
          %s1529 = scalar_lea.vmem [#allocation3], %s1528
          %v1530 = vld [vmem:[%s1529] sm:$0xf]
          %v1531 = vld [vmem:[%s1529 + $0x4] sm:$0xf]
          %v1532 = vld [vmem:[%s1529 + $0x8] sm:$0xf]
          %v1533 = vld [vmem:[%s1529 + $0xc] sm:$0xf]
          %v1534 = vld [vmem:[%s1529 + $0x10] sm:$0xf]
          %v1535 = vld [vmem:[%s1529 + $0x14] sm:$0xf]
          %v1536 = vld [vmem:[%s1529 + $0x18] sm:$0xf]
          %v1537 = vld [vmem:[%s1529 + $0x1c] sm:$0xf]
          %v1538 = vld [vmem:[%s1529 + $0x20] sm:$0xf]
          %v1539 = vld [vmem:[%s1529 + $0x24] sm:$0xf]
          %v1540 = vld [vmem:[%s1529 + $0x28] sm:$0xf]
          %v1541 = vld [vmem:[%s1529 + $0x2c] sm:$0xf]
          %v1542 = vld [vmem:[%s1529 + $0x30] sm:$0xf]
          %v1543 = vld [vmem:[%s1529 + $0x34] sm:$0xf]
          %v1544 = vld [vmem:[%s1529 + $0x38] sm:$0xf]
          %v1545 = vld [vmem:[%s1529 + $0x3c] sm:$0xf]
          %v1546 = vunpack.c.l.bf16 %v1530
          %v1547 = vunpack.c.l.bf16 %v1531
          %v1548 = vunpack.c.l.bf16 %v1532
          %v1549 = vunpack.c.l.bf16 %v1533
          %v1550 = vunpack.c.l.bf16 %v1534
          %v1551 = vunpack.c.l.bf16 %v1535
          %v1552 = vunpack.c.l.bf16 %v1536
          %v1553 = vunpack.c.l.bf16 %v1537
          %v1554 = vunpack.c.l.bf16 %v1538
          %v1555 = vunpack.c.l.bf16 %v1539
          %v1556 = vunpack.c.l.bf16 %v1540
          %v1557 = vunpack.c.l.bf16 %v1541
          %v1558 = vunpack.c.l.bf16 %v1542
          %v1559 = vunpack.c.l.bf16 %v1543
          %v1560 = vunpack.c.l.bf16 %v1544
          %v1561 = vunpack.c.l.bf16 %v1545
          %v1578 = vunpack.c.l.b16 %v1478
          %v1579 = vunpack.c.h.b16 %v1478
          %v1580 = vunpack.c.l.b16 %v1479
          %v1581 = vunpack.c.h.b16 %v1479
          %v1582 = vunpack.c.l.b16 %v1480
          %v1583 = vunpack.c.h.b16 %v1480
          %v1584 = vunpack.c.l.b16 %v1481
          %v1585 = vunpack.c.h.b16 %v1481
          %v1586 = vunpack.c.l.b16 %v1482
          %v1587 = vunpack.c.h.b16 %v1482
          %v1588 = vunpack.c.l.b16 %v1483
          %v1589 = vunpack.c.h.b16 %v1483
          %v1590 = vunpack.c.l.b16 %v1484
          %v1591 = vunpack.c.h.b16 %v1484
          %v1592 = vunpack.c.l.b16 %v1485
          %v1593 = vunpack.c.h.b16 %v1485
          %v1594 = vunpack.c.l.b16 %v1486
          %v1595 = vunpack.c.h.b16 %v1486
          %v1596 = vunpack.c.l.b16 %v1487
          %v1597 = vunpack.c.h.b16 %v1487
          %v1598 = vunpack.c.l.b16 %v1488
          %v1599 = vunpack.c.h.b16 %v1488
          %v1600 = vunpack.c.l.b16 %v1489
          %v1601 = vunpack.c.h.b16 %v1489
          %v1602 = vunpack.c.l.b16 %v1490
          %v1603 = vunpack.c.h.b16 %v1490
          %v1604 = vunpack.c.l.b16 %v1491
          %v1605 = vunpack.c.h.b16 %v1491
          %v1606 = vunpack.c.l.b16 %v1492
          %v1607 = vunpack.c.h.b16 %v1492
          %v1608 = vunpack.c.l.b16 %v1493
          %v1609 = vunpack.c.h.b16 %v1493
          %v1610 = vpack.c.b16 %v1580, %v1578
          %v1611 = vpack.c.b16 %v1581, %v1579
          %v1612 = vpack.c.b16 %v1584, %v1582
          %v1613 = vpack.c.b16 %v1585, %v1583
          %v1614 = vpack.c.b16 %v1588, %v1586
          %v1615 = vpack.c.b16 %v1589, %v1587
          %v1616 = vpack.c.b16 %v1592, %v1590
          %v1617 = vpack.c.b16 %v1593, %v1591
          %v1618 = vpack.c.b16 %v1596, %v1594
          %v1619 = vpack.c.b16 %v1597, %v1595
          %v1620 = vpack.c.b16 %v1600, %v1598
          %v1621 = vpack.c.b16 %v1601, %v1599
          %v1622 = vpack.c.b16 %v1604, %v1602
          %v1623 = vpack.c.b16 %v1605, %v1603
          %v1624 = vpack.c.b16 %v1608, %v1606
          %v1625 = vpack.c.b16 %v1609, %v1607
          %v1674 = vunpack.c.l.b16 %v1494
          %v1675 = vunpack.c.l.b16 %v1495
          %v1676 = vunpack.c.l.b16 %v1496
          %v1677 = vunpack.c.l.b16 %v1497
          %v1678 = vunpack.c.l.b16 %v1498
          %v1679 = vunpack.c.l.b16 %v1499
          %v1680 = vunpack.c.l.b16 %v1500
          %v1681 = vunpack.c.l.b16 %v1501
          %v1682 = vunpack.c.l.b16 %v1502
          %v1683 = vunpack.c.l.b16 %v1503
          %v1684 = vunpack.c.l.b16 %v1504
          %v1685 = vunpack.c.l.b16 %v1505
          %v1686 = vunpack.c.l.b16 %v1506
          %v1687 = vunpack.c.l.b16 %v1507
          %v1688 = vunpack.c.l.b16 %v1508
          %v1689 = vunpack.c.l.b16 %v1509
          %v1690 = vunpack.c.l.b16 %v1510
          %v1691 = vunpack.c.l.b16 %v1511
          %v1692 = vunpack.c.l.b16 %v1512
          %v1693 = vunpack.c.l.b16 %v1513
          %v1694 = vunpack.c.l.b16 %v1514
          %v1695 = vunpack.c.l.b16 %v1515
          %v1696 = vunpack.c.l.b16 %v1516
          %v1697 = vunpack.c.l.b16 %v1517
          %v1698 = vunpack.c.l.b16 %v1518
          %v1699 = vunpack.c.l.b16 %v1519
          %v1700 = vunpack.c.l.b16 %v1520
          %v1701 = vunpack.c.l.b16 %v1521
          %v1702 = vunpack.c.l.b16 %v1522
          %v1703 = vunpack.c.l.b16 %v1523
          %v1704 = vunpack.c.l.b16 %v1524
          %v1705 = vunpack.c.l.b16 %v1525
          %v1706 = vpack.c.b16 %v1675, %v1674
          %v1707 = vpack.c.b16 %v1677, %v1676
          %v1708 = vpack.c.b16 %v1679, %v1678
          %v1709 = vpack.c.b16 %v1681, %v1680
          %v1710 = vpack.c.b16 %v1683, %v1682
          %v1711 = vpack.c.b16 %v1685, %v1684
          %v1712 = vpack.c.b16 %v1687, %v1686
          %v1713 = vpack.c.b16 %v1689, %v1688
          %v1714 = vpack.c.b16 %v1691, %v1690
          %v1715 = vpack.c.b16 %v1693, %v1692
          %v1716 = vpack.c.b16 %v1695, %v1694
          %v1717 = vpack.c.b16 %v1697, %v1696
          %v1718 = vpack.c.b16 %v1699, %v1698
          %v1719 = vpack.c.b16 %v1701, %v1700
          %v1720 = vpack.c.b16 %v1703, %v1702
          %v1721 = vpack.c.b16 %v1705, %v1704
          %1738 = vmatprep.subr.bf16.mxu0 0
          %1739 = vmatpush1.bf16.msra.mxu0 %v1713
          %1740 = vmatprep.subr.bf16.mxu0 0
          %1741 = vmatpush1.bf16.msra.mxu0 %v1712
          %1742 = vmatprep.subr.bf16.mxu0 0
          %1743 = vmatpush1.bf16.msra.mxu0 %v1711
          %1744 = vmatprep.subr.bf16.mxu0 0
          %1745 = vmatpush1.bf16.msra.mxu0 %v1710
          %1746 = vmatprep.subr.bf16.mxu0 0
          %1747 = vmatpush1.bf16.msra.mxu0 %v1709
          %1748 = vmatprep.subr.bf16.mxu0 0
          %1749 = vmatpush1.bf16.msra.mxu0 %v1708
          %1750 = vmatprep.subr.bf16.mxu0 0
          %1751 = vmatpush1.bf16.msra.mxu0 %v1707
          %1752 = vmatprep.subr.bf16.mxu0 0
          %1753 = vmatpush1.bf16.msra.mxu0 %v1706
          %1754 = vmatprep.subr.bf16.mxu0 0
          %1755 = vmatpush2.bf16.msra.mxu0 %v1721
          %1756 = vmatprep.subr.bf16.mxu0 0
          %1757 = vmatpush2.bf16.msra.mxu0 %v1720
          %1758 = vmatprep.subr.bf16.mxu0 0
          %1759 = vmatpush2.bf16.msra.mxu0 %v1719
          %1760 = vmatprep.subr.bf16.mxu0 0
          %1761 = vmatpush2.bf16.msra.mxu0 %v1718
          %1762 = vmatprep.subr.bf16.mxu0 0
          %1763 = vmatpush2.bf16.msra.mxu0 %v1717
          %1764 = vmatprep.subr.bf16.mxu0 0
          %1765 = vmatpush2.bf16.msra.mxu0 %v1716
          %1766 = vmatprep.subr.bf16.mxu0 0
          %1767 = vmatpush2.bf16.msra.mxu0 %v1715
          %1768 = vmatprep.subr.bf16.mxu0 0
          %1769 = vmatpush2.bf16.msra.mxu0 %v1714
          %1770 = vmatprep.mubr.bf16.mxu0 %v1611
          %1771 = vmatmul.mubr.bf16.gmra.mxu0 %v1610
          %v1772 = vpop.f32.mrf.mxu0
          %v1773 = vadd.f32 %v1546, %v1772
          %v1774 = vpop.f32.mrf.mxu0
          %v1775 = vpop.f32.mrf.mxu0
          %v1776 = vadd.f32 %v1547, %v1775
          %v1777 = vpop.f32.mrf.mxu0
          %1778 = vmatprep.mubr.bf16.mxu0 %v1613
          %1779 = vmatmul.mubr.bf16.gmra.mxu0 %v1612
          %v1780 = vpop.f32.mrf.mxu0
          %v1781 = vadd.f32 %v1548, %v1780
          %v1782 = vpop.f32.mrf.mxu0
          %v1783 = vpop.f32.mrf.mxu0
          %v1784 = vadd.f32 %v1549, %v1783
          %v1785 = vpop.f32.mrf.mxu0
          %1786 = vmatprep.mubr.bf16.mxu0 %v1615
          %1787 = vmatmul.mubr.bf16.gmra.mxu0 %v1614
          %v1788 = vpop.f32.mrf.mxu0
          %v1789 = vadd.f32 %v1550, %v1788
          %v1790 = vpop.f32.mrf.mxu0
          %v1791 = vpop.f32.mrf.mxu0
          %v1792 = vadd.f32 %v1551, %v1791
          %v1793 = vpop.f32.mrf.mxu0
          %1794 = vmatprep.mubr.bf16.mxu0 %v1617
          %1795 = vmatmul.mubr.bf16.gmra.mxu0 %v1616
          %v1796 = vpop.f32.mrf.mxu0
          %v1797 = vadd.f32 %v1552, %v1796
          %v1798 = vpop.f32.mrf.mxu0
          %v1799 = vpop.f32.mrf.mxu0
          %v1800 = vadd.f32 %v1553, %v1799
          %v1801 = vpop.f32.mrf.mxu0
          %1802 = vmatprep.mubr.bf16.mxu0 %v1619
          %1803 = vmatmul.mubr.bf16.gmra.mxu0 %v1618
          %v1804 = vpop.f32.mrf.mxu0
          %v1805 = vadd.f32 %v1554, %v1804
          %v1806 = vpop.f32.mrf.mxu0
          %v1807 = vpop.f32.mrf.mxu0
          %v1808 = vadd.f32 %v1555, %v1807
          %v1809 = vpop.f32.mrf.mxu0
          %1810 = vmatprep.mubr.bf16.mxu0 %v1621
          %1811 = vmatmul.mubr.bf16.gmra.mxu0 %v1620
          %v1812 = vpop.f32.mrf.mxu0
          %v1813 = vadd.f32 %v1556, %v1812
          %v1814 = vpop.f32.mrf.mxu0
          %v1815 = vpop.f32.mrf.mxu0
          %v1816 = vadd.f32 %v1557, %v1815
          %v1817 = vpop.f32.mrf.mxu0
          %1818 = vmatprep.mubr.bf16.mxu0 %v1623
          %1819 = vmatmul.mubr.bf16.gmra.mxu0 %v1622
          %v1820 = vpop.f32.mrf.mxu0
          %v1821 = vadd.f32 %v1558, %v1820
          %v1822 = vpop.f32.mrf.mxu0
          %v1823 = vpop.f32.mrf.mxu0
          %v1824 = vadd.f32 %v1559, %v1823
          %v1825 = vpop.f32.mrf.mxu0
          %1826 = vmatprep.mubr.bf16.mxu0 %v1625
          %1827 = vmatmul.mubr.bf16.gmra.mxu0 %v1624
          %v1828 = vpop.f32.mrf.mxu0
          %v1829 = vadd.f32 %v1560, %v1828
          %v1830 = vpop.f32.mrf.mxu0
          %v1831 = vpop.f32.mrf.mxu0
          %v1832 = vadd.f32 %v1561, %v1831
          %v1833 = vpop.f32.mrf.mxu0
          %1834 = vdwg.mxu0
          %1836 = vset.pattern.permute.xlu0 0
          %1837 = vperm.xlu0 %1836, %v1462
          %v1838 = vpop.permute.xlu0 %1837
          %1841 = vset.pattern.permute.xlu0 0
          %1842 = vperm.xlu0 %1841, %v1463
          %v1843 = vpop.permute.xlu0 %1842
          %1846 = vset.pattern.permute.xlu0 0
          %1847 = vperm.xlu0 %1846, %v1464
          %v1848 = vpop.permute.xlu0 %1847
          %1851 = vset.pattern.permute.xlu0 0
          %1852 = vperm.xlu0 %1851, %v1465
          %v1853 = vpop.permute.xlu0 %1852
          %1856 = vset.pattern.permute.xlu0 0
          %1857 = vperm.xlu0 %1856, %v1466
          %v1858 = vpop.permute.xlu0 %1857
          %1861 = vset.pattern.permute.xlu0 0
          %1862 = vperm.xlu0 %1861, %v1467
          %v1863 = vpop.permute.xlu0 %1862
          %1866 = vset.pattern.permute.xlu0 0
          %1867 = vperm.xlu0 %1866, %v1468
          %v1868 = vpop.permute.xlu0 %1867
          %1871 = vset.pattern.permute.xlu0 0
          %1872 = vperm.xlu0 %1871, %v1469
          %v1873 = vpop.permute.xlu0 %1872
          %1876 = vset.pattern.permute.xlu0 0
          %1877 = vperm.xlu0 %1876, %v1470
          %v1878 = vpop.permute.xlu0 %1877
          %1881 = vset.pattern.permute.xlu0 0
          %1882 = vperm.xlu0 %1881, %v1471
          %v1883 = vpop.permute.xlu0 %1882
          %1886 = vset.pattern.permute.xlu0 0
          %1887 = vperm.xlu0 %1886, %v1472
          %v1888 = vpop.permute.xlu0 %1887
          %1891 = vset.pattern.permute.xlu0 0
          %1892 = vperm.xlu0 %1891, %v1473
          %v1893 = vpop.permute.xlu0 %1892
          %1896 = vset.pattern.permute.xlu0 0
          %1897 = vperm.xlu0 %1896, %v1474
          %v1898 = vpop.permute.xlu0 %1897
          %1901 = vset.pattern.permute.xlu0 0
          %1902 = vperm.xlu0 %1901, %v1475
          %v1903 = vpop.permute.xlu0 %1902
          %1906 = vset.pattern.permute.xlu0 0
          %1907 = vperm.xlu0 %1906, %v1476
          %v1908 = vpop.permute.xlu0 %1907
          %1911 = vset.pattern.permute.xlu0 0
          %1912 = vperm.xlu0 %1911, %v1477
          %v1913 = vpop.permute.xlu0 %1912
          %v1915 = vmul.f32 %v1838, %v1773
          %v1916 = vmul.f32 %v1843, %v1776
          %v1917 = vmul.f32 %v1848, %v1781
          %v1918 = vmul.f32 %v1853, %v1784
          %v1919 = vmul.f32 %v1858, %v1789
          %v1920 = vmul.f32 %v1863, %v1792
          %v1921 = vmul.f32 %v1868, %v1797
          %v1922 = vmul.f32 %v1873, %v1800
          %v1923 = vmul.f32 %v1878, %v1805
          %v1924 = vmul.f32 %v1883, %v1808
          %v1925 = vmul.f32 %v1888, %v1813
          %v1926 = vmul.f32 %v1893, %v1816
          %v1927 = vmul.f32 %v1898, %v1821
          %v1928 = vmul.f32 %v1903, %v1824
          %v1929 = vmul.f32 %v1908, %v1829
          %v1930 = vmul.f32 %v1913, %v1832
          %p1931 = scmp.lt.s32.totalorder %s25, 0
          %s1932 = ssub.s32 0, %s25
          %s1933 = scalar_select %p1931, %s1932, %s25
          %s1934 = sand.u32 %s1933, 1
          %s1935 = ssub.s32 0, %s1934
          %s1936 = scalar_select %p1931, %s1935, %s1934
          %p1937 = scmp.ne.s32.totalorder %s1936, 0
          %p1938 = scmp.lt.s32.totalorder %s1936, 0
          %p1939 = pnand %p1938, %p1937
          %p1940 = pneg %p1939
          %s1941 = sadd.s32 %s1936, 2
          %s1942 = scalar_select %p1940, %s1941, %s1936
          %p1943 = scmp.eq.s32.totalorder %s1942, 1
          // Predicated region
          $region69: #{tpu_custom_call.1} parent=63 // pred_check
            %p1944 = pneg %p1943
          $region70: #{tpu_custom_call.1} parent=63 // pred_check_branch
            %1946 = sbr.rel (%p1944) target = $region72
          $region71: #{tpu_custom_call.1} parent=63 // pred_region
            %s1947 = scalar_lea.vmem [#allocation2], %s406
            %vm1948 = vcmask 392192
            %1949 = vst.msk [vmem:[%s1947] sm:$0xff] %vm1948, %v1915
            %1950 = vst.msk [vmem:[%s1947 + $0x8] sm:$0xff] %vm1948, %v1916
            %1951 = vst.msk [vmem:[%s1947 + $0x10] sm:$0xff] %vm1948, %v1917
            %1952 = vst.msk [vmem:[%s1947 + $0x18] sm:$0xff] %vm1948, %v1918
            %1953 = vst.msk [vmem:[%s1947 + $0x20] sm:$0xff] %vm1948, %v1919
            %1954 = vst.msk [vmem:[%s1947 + $0x28] sm:$0xff] %vm1948, %v1920
            %1955 = vst.msk [vmem:[%s1947 + $0x30] sm:$0xff] %vm1948, %v1921
            %1956 = vst.msk [vmem:[%s1947 + $0x38] sm:$0xff] %vm1948, %v1922
            %1957 = vst.msk [vmem:[%s1947 + $0x40] sm:$0xff] %vm1948, %v1923
            %1958 = vst.msk [vmem:[%s1947 + $0x48] sm:$0xff] %vm1948, %v1924
            %1959 = vst.msk [vmem:[%s1947 + $0x50] sm:$0xff] %vm1948, %v1925
            %1960 = vst.msk [vmem:[%s1947 + $0x58] sm:$0xff] %vm1948, %v1926
            %1961 = vst.msk [vmem:[%s1947 + $0x60] sm:$0xff] %vm1948, %v1927
            %1962 = vst.msk [vmem:[%s1947 + $0x68] sm:$0xff] %vm1948, %v1928
            %1963 = vst.msk [vmem:[%s1947 + $0x70] sm:$0xff] %vm1948, %v1929
            %1964 = vst.msk [vmem:[%s1947 + $0x78] sm:$0xff] %vm1948, %v1930
          $region72: #{tpu_custom_call.1} parent=63 // pred_fallthru
            _
          %p1965 = scmp.eq.s32.totalorder %s1942, 0
          // Predicated region
          $region73: #{tpu_custom_call.1} parent=63 // pred_check
            %p1966 = pneg %p1965
          $region74: #{tpu_custom_call.1} parent=63 // pred_check_branch
            %1968 = sbr.rel (%p1966) target = $region76
          $region75: #{tpu_custom_call.1} parent=63 // pred_region
            %v1969 = vmul.f32 %v1915, 0.5
            %v1970 = vmul.f32 %v1916, 0.5
            %v1971 = vmul.f32 %v1917, 0.5
            %v1972 = vmul.f32 %v1918, 0.5
            %v1973 = vmul.f32 %v1919, 0.5
            %v1974 = vmul.f32 %v1920, 0.5
            %v1975 = vmul.f32 %v1921, 0.5
            %v1976 = vmul.f32 %v1922, 0.5
            %v1977 = vmul.f32 %v1923, 0.5
            %v1978 = vmul.f32 %v1924, 0.5
            %v1979 = vmul.f32 %v1925, 0.5
            %v1980 = vmul.f32 %v1926, 0.5
            %v1981 = vmul.f32 %v1927, 0.5
            %v1982 = vmul.f32 %v1928, 0.5
            %v1983 = vmul.f32 %v1929, 0.5
            %v1984 = vmul.f32 %v1930, 0.5
            %s1985 = scalar_lea.vmem [#allocation4], %s406
            %v1986 = vld [vmem:[%s1985] sm:$0xff]
            %v1987 = vld [vmem:[%s1985 + $0x8] sm:$0xff]
            %v1988 = vld [vmem:[%s1985 + $0x10] sm:$0xff]
            %v1989 = vld [vmem:[%s1985 + $0x18] sm:$0xff]
            %v1990 = vld [vmem:[%s1985 + $0x20] sm:$0xff]
            %v1991 = vld [vmem:[%s1985 + $0x28] sm:$0xff]
            %v1992 = vld [vmem:[%s1985 + $0x30] sm:$0xff]
            %v1993 = vld [vmem:[%s1985 + $0x38] sm:$0xff]
            %v1994 = vld [vmem:[%s1985 + $0x40] sm:$0xff]
            %v1995 = vld [vmem:[%s1985 + $0x48] sm:$0xff]
            %v1996 = vld [vmem:[%s1985 + $0x50] sm:$0xff]
            %v1997 = vld [vmem:[%s1985 + $0x58] sm:$0xff]
            %v1998 = vld [vmem:[%s1985 + $0x60] sm:$0xff]
            %v1999 = vld [vmem:[%s1985 + $0x68] sm:$0xff]
            %v2000 = vld [vmem:[%s1985 + $0x70] sm:$0xff]
            %v2001 = vld [vmem:[%s1985 + $0x78] sm:$0xff]
            %v2002 = vadd.f32 %v1969, %v1986
            %v2003 = vadd.f32 %v1970, %v1987
            %v2004 = vadd.f32 %v1971, %v1988
            %v2005 = vadd.f32 %v1972, %v1989
            %v2006 = vadd.f32 %v1973, %v1990
            %v2007 = vadd.f32 %v1974, %v1991
            %v2008 = vadd.f32 %v1975, %v1992
            %v2009 = vadd.f32 %v1976, %v1993
            %v2010 = vadd.f32 %v1977, %v1994
            %v2011 = vadd.f32 %v1978, %v1995
            %v2012 = vadd.f32 %v1979, %v1996
            %v2013 = vadd.f32 %v1980, %v1997
            %v2014 = vadd.f32 %v1981, %v1998
            %v2015 = vadd.f32 %v1982, %v1999
            %v2016 = vadd.f32 %v1983, %v2000
            %v2017 = vadd.f32 %v1984, %v2001
            %s2018 = scalar_lea.vmem [#allocation2], %s406
            %vm2019 = vcmask 392192
            %2020 = vst.msk [vmem:[%s2018] sm:$0xff] %vm2019, %v2002
            %2021 = vst.msk [vmem:[%s2018 + $0x8] sm:$0xff] %vm2019, %v2003
            %2022 = vst.msk [vmem:[%s2018 + $0x10] sm:$0xff] %vm2019, %v2004
            %2023 = vst.msk [vmem:[%s2018 + $0x18] sm:$0xff] %vm2019, %v2005
            %2024 = vst.msk [vmem:[%s2018 + $0x20] sm:$0xff] %vm2019, %v2006
            %2025 = vst.msk [vmem:[%s2018 + $0x28] sm:$0xff] %vm2019, %v2007
            %2026 = vst.msk [vmem:[%s2018 + $0x30] sm:$0xff] %vm2019, %v2008
            %2027 = vst.msk [vmem:[%s2018 + $0x38] sm:$0xff] %vm2019, %v2009
            %2028 = vst.msk [vmem:[%s2018 + $0x40] sm:$0xff] %vm2019, %v2010
            %2029 = vst.msk [vmem:[%s2018 + $0x48] sm:$0xff] %vm2019, %v2011
            %2030 = vst.msk [vmem:[%s2018 + $0x50] sm:$0xff] %vm2019, %v2012
            %2031 = vst.msk [vmem:[%s2018 + $0x58] sm:$0xff] %vm2019, %v2013
            %2032 = vst.msk [vmem:[%s2018 + $0x60] sm:$0xff] %vm2019, %v2014
            %2033 = vst.msk [vmem:[%s2018 + $0x68] sm:$0xff] %vm2019, %v2015
            %2034 = vst.msk [vmem:[%s2018 + $0x70] sm:$0xff] %vm2019, %v2016
            %2035 = vst.msk [vmem:[%s2018 + $0x78] sm:$0xff] %vm2019, %v2017
          $region76: #{tpu_custom_call.1} parent=63 // pred_fallthru
            _
        $region64: #{tpu_custom_call.1} parent=51 // pred_fallthru
          _
        %s2036 = scalar_lea.vmem [#allocation2], %s406
        %v2037 = vld [vmem:[%s2036] sm:$0xff]
        %v2038 = vld [vmem:[%s2036 + $0x8] sm:$0xff]
        %v2039 = vld [vmem:[%s2036 + $0x10] sm:$0xff]
        %v2040 = vld [vmem:[%s2036 + $0x18] sm:$0xff]
        %v2041 = vld [vmem:[%s2036 + $0x20] sm:$0xff]
        %v2042 = vld [vmem:[%s2036 + $0x28] sm:$0xff]
        %v2043 = vld [vmem:[%s2036 + $0x30] sm:$0xff]
        %v2044 = vld [vmem:[%s2036 + $0x38] sm:$0xff]
        %v2045 = vld [vmem:[%s2036 + $0x40] sm:$0xff]
        %v2046 = vld [vmem:[%s2036 + $0x48] sm:$0xff]
        %v2047 = vld [vmem:[%s2036 + $0x50] sm:$0xff]
        %v2048 = vld [vmem:[%s2036 + $0x58] sm:$0xff]
        %v2049 = vld [vmem:[%s2036 + $0x60] sm:$0xff]
        %v2050 = vld [vmem:[%s2036 + $0x68] sm:$0xff]
        %v2051 = vld [vmem:[%s2036 + $0x70] sm:$0xff]
        %v2052 = vld [vmem:[%s2036 + $0x78] sm:$0xff]
        %v2053 = vld [vmem:[%s397] sm:$0xff]
        %v2054 = vld [vmem:[%s397 + $0x8] sm:$0xff]
        %v2055 = vld [vmem:[%s397 + $0x10] sm:$0xff]
        %v2056 = vld [vmem:[%s397 + $0x18] sm:$0xff]
        %v2057 = vld [vmem:[%s397 + $0x20] sm:$0xff]
        %v2058 = vld [vmem:[%s397 + $0x28] sm:$0xff]
        %v2059 = vld [vmem:[%s397 + $0x30] sm:$0xff]
        %v2060 = vld [vmem:[%s397 + $0x38] sm:$0xff]
        %v2061 = vld [vmem:[%s397 + $0x40] sm:$0xff]
        %v2062 = vld [vmem:[%s397 + $0x48] sm:$0xff]
        %v2063 = vld [vmem:[%s397 + $0x50] sm:$0xff]
        %v2064 = vld [vmem:[%s397 + $0x58] sm:$0xff]
        %v2065 = vld [vmem:[%s397 + $0x60] sm:$0xff]
        %v2066 = vld [vmem:[%s397 + $0x68] sm:$0xff]
        %v2067 = vld [vmem:[%s397 + $0x70] sm:$0xff]
        %v2068 = vld [vmem:[%s397 + $0x78] sm:$0xff]
        %2070 = vset.pattern.permute.xlu0 0
        %2071 = vperm.xlu0 %2070, %v2053
        %v2072 = vpop.permute.xlu0 %2071
        %2075 = vset.pattern.permute.xlu0 0
        %2076 = vperm.xlu0 %2075, %v2054
        %v2077 = vpop.permute.xlu0 %2076
        %2080 = vset.pattern.permute.xlu0 0
        %2081 = vperm.xlu0 %2080, %v2055
        %v2082 = vpop.permute.xlu0 %2081
        %2085 = vset.pattern.permute.xlu0 0
        %2086 = vperm.xlu0 %2085, %v2056
        %v2087 = vpop.permute.xlu0 %2086
        %2090 = vset.pattern.permute.xlu0 0
        %2091 = vperm.xlu0 %2090, %v2057
        %v2092 = vpop.permute.xlu0 %2091
        %2095 = vset.pattern.permute.xlu0 0
        %2096 = vperm.xlu0 %2095, %v2058
        %v2097 = vpop.permute.xlu0 %2096
        %2100 = vset.pattern.permute.xlu0 0
        %2101 = vperm.xlu0 %2100, %v2059
        %v2102 = vpop.permute.xlu0 %2101
        %2105 = vset.pattern.permute.xlu0 0
        %2106 = vperm.xlu0 %2105, %v2060
        %v2107 = vpop.permute.xlu0 %2106
        %2110 = vset.pattern.permute.xlu0 0
        %2111 = vperm.xlu0 %2110, %v2061
        %v2112 = vpop.permute.xlu0 %2111
        %2115 = vset.pattern.permute.xlu0 0
        %2116 = vperm.xlu0 %2115, %v2062
        %v2117 = vpop.permute.xlu0 %2116
        %2120 = vset.pattern.permute.xlu0 0
        %2121 = vperm.xlu0 %2120, %v2063
        %v2122 = vpop.permute.xlu0 %2121
        %2125 = vset.pattern.permute.xlu0 0
        %2126 = vperm.xlu0 %2125, %v2064
        %v2127 = vpop.permute.xlu0 %2126
        %2130 = vset.pattern.permute.xlu0 0
        %2131 = vperm.xlu0 %2130, %v2065
        %v2132 = vpop.permute.xlu0 %2131
        %2135 = vset.pattern.permute.xlu0 0
        %2136 = vperm.xlu0 %2135, %v2066
        %v2137 = vpop.permute.xlu0 %2136
        %2140 = vset.pattern.permute.xlu0 0
        %2141 = vperm.xlu0 %2140, %v2067
        %v2142 = vpop.permute.xlu0 %2141
        %2145 = vset.pattern.permute.xlu0 0
        %2146 = vperm.xlu0 %2145, %v2068
        %v2147 = vpop.permute.xlu0 %2146
        %v2149 = vmul.f32 %v2072, %v2037
        %v2150 = vmul.f32 %v2077, %v2038
        %v2151 = vmul.f32 %v2082, %v2039
        %v2152 = vmul.f32 %v2087, %v2040
        %v2153 = vmul.f32 %v2092, %v2041
        %v2154 = vmul.f32 %v2097, %v2042
        %v2155 = vmul.f32 %v2102, %v2043
        %v2156 = vmul.f32 %v2107, %v2044
        %v2157 = vmul.f32 %v2112, %v2045
        %v2158 = vmul.f32 %v2117, %v2046
        %v2159 = vmul.f32 %v2122, %v2047
        %v2160 = vmul.f32 %v2127, %v2048
        %v2161 = vmul.f32 %v2132, %v2049
        %v2162 = vmul.f32 %v2137, %v2050
        %v2163 = vmul.f32 %v2142, %v2051
        %v2164 = vmul.f32 %v2147, %v2052
        %v2165 = vadd.f32 %v2149, 0.0
        %v2166 = vadd.f32 %v2150, 0.0
        %v2167 = vadd.f32 %v2151, 0.0
        %v2168 = vadd.f32 %v2152, 0.0
        %v2169 = vadd.f32 %v2153, 0.0
        %v2170 = vadd.f32 %v2154, 0.0
        %v2171 = vadd.f32 %v2155, 0.0
        %v2172 = vadd.f32 %v2156, 0.0
        %v2173 = vadd.f32 %v2157, 0.0
        %v2174 = vadd.f32 %v2158, 0.0
        %v2175 = vadd.f32 %v2159, 0.0
        %v2176 = vadd.f32 %v2160, 0.0
        %v2177 = vadd.f32 %v2161, 0.0
        %v2178 = vadd.f32 %v2162, 0.0
        %v2179 = vadd.f32 %v2163, 0.0
        %v2180 = vadd.f32 %v2164, 0.0
        %2181 = vset.pattern.permute.xlu0 1
        %2182 = vperm.xlu0 %2181, %v2053
        %v2183 = vpop.permute.xlu0 %2182
        %2185 = vset.pattern.permute.xlu0 1
        %2186 = vperm.xlu0 %2185, %v2054
        %v2187 = vpop.permute.xlu0 %2186
        %2189 = vset.pattern.permute.xlu0 1
        %2190 = vperm.xlu0 %2189, %v2055
        %v2191 = vpop.permute.xlu0 %2190
        %2193 = vset.pattern.permute.xlu0 1
        %2194 = vperm.xlu0 %2193, %v2056
        %v2195 = vpop.permute.xlu0 %2194
        %2197 = vset.pattern.permute.xlu0 1
        %2198 = vperm.xlu0 %2197, %v2057
        %v2199 = vpop.permute.xlu0 %2198
        %2201 = vset.pattern.permute.xlu0 1
        %2202 = vperm.xlu0 %2201, %v2058
        %v2203 = vpop.permute.xlu0 %2202
        %2205 = vset.pattern.permute.xlu0 1
        %2206 = vperm.xlu0 %2205, %v2059
        %v2207 = vpop.permute.xlu0 %2206
        %2209 = vset.pattern.permute.xlu0 1
        %2210 = vperm.xlu0 %2209, %v2060
        %v2211 = vpop.permute.xlu0 %2210
        %2213 = vset.pattern.permute.xlu0 1
        %2214 = vperm.xlu0 %2213, %v2061
        %v2215 = vpop.permute.xlu0 %2214
        %2217 = vset.pattern.permute.xlu0 1
        %2218 = vperm.xlu0 %2217, %v2062
        %v2219 = vpop.permute.xlu0 %2218
        %2221 = vset.pattern.permute.xlu0 1
        %2222 = vperm.xlu0 %2221, %v2063
        %v2223 = vpop.permute.xlu0 %2222
        %2225 = vset.pattern.permute.xlu0 1
        %2226 = vperm.xlu0 %2225, %v2064
        %v2227 = vpop.permute.xlu0 %2226
        %2229 = vset.pattern.permute.xlu0 1
        %2230 = vperm.xlu0 %2229, %v2065
        %v2231 = vpop.permute.xlu0 %2230
        %2233 = vset.pattern.permute.xlu0 1
        %2234 = vperm.xlu0 %2233, %v2066
        %v2235 = vpop.permute.xlu0 %2234
        %2237 = vset.pattern.permute.xlu0 1
        %2238 = vperm.xlu0 %2237, %v2067
        %v2239 = vpop.permute.xlu0 %2238
        %2241 = vset.pattern.permute.xlu0 1
        %2242 = vperm.xlu0 %2241, %v2068
        %v2243 = vpop.permute.xlu0 %2242
        %v2245 = vmul.f32 %v2183, %v2037
        %v2246 = vmul.f32 %v2187, %v2038
        %v2247 = vmul.f32 %v2191, %v2039
        %v2248 = vmul.f32 %v2195, %v2040
        %v2249 = vmul.f32 %v2199, %v2041
        %v2250 = vmul.f32 %v2203, %v2042
        %v2251 = vmul.f32 %v2207, %v2043
        %v2252 = vmul.f32 %v2211, %v2044
        %v2253 = vmul.f32 %v2215, %v2045
        %v2254 = vmul.f32 %v2219, %v2046
        %v2255 = vmul.f32 %v2223, %v2047
        %v2256 = vmul.f32 %v2227, %v2048
        %v2257 = vmul.f32 %v2231, %v2049
        %v2258 = vmul.f32 %v2235, %v2050
        %v2259 = vmul.f32 %v2239, %v2051
        %v2260 = vmul.f32 %v2243, %v2052
        %2277 = vrot.lane.b32.xlu0 %v2245, 112
        %v2278 = vpop.permute.xlu0 %2277
        %2279 = vrot.lane.b32.xlu0 %v2246, 112
        %v2280 = vpop.permute.xlu0 %2279
        %2281 = vrot.lane.b32.xlu0 %v2247, 112
        %v2282 = vpop.permute.xlu0 %2281
        %2283 = vrot.lane.b32.xlu0 %v2248, 112
        %v2284 = vpop.permute.xlu0 %2283
        %2285 = vrot.lane.b32.xlu0 %v2249, 112
        %v2286 = vpop.permute.xlu0 %2285
        %2287 = vrot.lane.b32.xlu0 %v2250, 112
        %v2288 = vpop.permute.xlu0 %2287
        %2289 = vrot.lane.b32.xlu0 %v2251, 112
        %v2290 = vpop.permute.xlu0 %2289
        %2291 = vrot.lane.b32.xlu0 %v2252, 112
        %v2292 = vpop.permute.xlu0 %2291
        %2293 = vrot.lane.b32.xlu0 %v2253, 112
        %v2294 = vpop.permute.xlu0 %2293
        %2295 = vrot.lane.b32.xlu0 %v2254, 112
        %v2296 = vpop.permute.xlu0 %2295
        %2297 = vrot.lane.b32.xlu0 %v2255, 112
        %v2298 = vpop.permute.xlu0 %2297
        %2299 = vrot.lane.b32.xlu0 %v2256, 112
        %v2300 = vpop.permute.xlu0 %2299
        %2301 = vrot.lane.b32.xlu0 %v2257, 112
        %v2302 = vpop.permute.xlu0 %2301
        %2303 = vrot.lane.b32.xlu0 %v2258, 112
        %v2304 = vpop.permute.xlu0 %2303
        %2305 = vrot.lane.b32.xlu0 %v2259, 112
        %v2306 = vpop.permute.xlu0 %2305
        %2307 = vrot.lane.b32.xlu0 %v2260, 112
        %v2308 = vpop.permute.xlu0 %2307
        %v2325 = vadd.f32 %v2165, %v2278
        %v2326 = vadd.f32 %v2166, %v2280
        %v2327 = vadd.f32 %v2167, %v2282
        %v2328 = vadd.f32 %v2168, %v2284
        %v2329 = vadd.f32 %v2169, %v2286
        %v2330 = vadd.f32 %v2170, %v2288
        %v2331 = vadd.f32 %v2171, %v2290
        %v2332 = vadd.f32 %v2172, %v2292
        %v2333 = vadd.f32 %v2173, %v2294
        %v2334 = vadd.f32 %v2174, %v2296
        %v2335 = vadd.f32 %v2175, %v2298
        %v2336 = vadd.f32 %v2176, %v2300
        %v2337 = vadd.f32 %v2177, %v2302
        %v2338 = vadd.f32 %v2178, %v2304
        %v2339 = vadd.f32 %v2179, %v2306
        %v2340 = vadd.f32 %v2180, %v2308
        %2341 = vset.pattern.permute.xlu0 2
        %2342 = vperm.xlu0 %2341, %v2053
        %v2343 = vpop.permute.xlu0 %2342
        %2345 = vset.pattern.permute.xlu0 2
        %2346 = vperm.xlu0 %2345, %v2054
        %v2347 = vpop.permute.xlu0 %2346
        %2349 = vset.pattern.permute.xlu0 2
        %2350 = vperm.xlu0 %2349, %v2055
        %v2351 = vpop.permute.xlu0 %2350
        %2353 = vset.pattern.permute.xlu0 2
        %2354 = vperm.xlu0 %2353, %v2056
        %v2355 = vpop.permute.xlu0 %2354
        %2357 = vset.pattern.permute.xlu0 2
        %2358 = vperm.xlu0 %2357, %v2057
        %v2359 = vpop.permute.xlu0 %2358
        %2361 = vset.pattern.permute.xlu0 2
        %2362 = vperm.xlu0 %2361, %v2058
        %v2363 = vpop.permute.xlu0 %2362
        %2365 = vset.pattern.permute.xlu0 2
        %2366 = vperm.xlu0 %2365, %v2059
        %v2367 = vpop.permute.xlu0 %2366
        %2369 = vset.pattern.permute.xlu0 2
        %2370 = vperm.xlu0 %2369, %v2060
        %v2371 = vpop.permute.xlu0 %2370
        %2373 = vset.pattern.permute.xlu0 2
        %2374 = vperm.xlu0 %2373, %v2061
        %v2375 = vpop.permute.xlu0 %2374
        %2377 = vset.pattern.permute.xlu0 2
        %2378 = vperm.xlu0 %2377, %v2062
        %v2379 = vpop.permute.xlu0 %2378
        %2381 = vset.pattern.permute.xlu0 2
        %2382 = vperm.xlu0 %2381, %v2063
        %v2383 = vpop.permute.xlu0 %2382
        %2385 = vset.pattern.permute.xlu0 2
        %2386 = vperm.xlu0 %2385, %v2064
        %v2387 = vpop.permute.xlu0 %2386
        %2389 = vset.pattern.permute.xlu0 2
        %2390 = vperm.xlu0 %2389, %v2065
        %v2391 = vpop.permute.xlu0 %2390
        %2393 = vset.pattern.permute.xlu0 2
        %2394 = vperm.xlu0 %2393, %v2066
        %v2395 = vpop.permute.xlu0 %2394
        %2397 = vset.pattern.permute.xlu0 2
        %2398 = vperm.xlu0 %2397, %v2067
        %v2399 = vpop.permute.xlu0 %2398
        %2401 = vset.pattern.permute.xlu0 2
        %2402 = vperm.xlu0 %2401, %v2068
        %v2403 = vpop.permute.xlu0 %2402
        %v2405 = vmul.f32 %v2343, %v2037
        %v2406 = vmul.f32 %v2347, %v2038
        %v2407 = vmul.f32 %v2351, %v2039
        %v2408 = vmul.f32 %v2355, %v2040
        %v2409 = vmul.f32 %v2359, %v2041
        %v2410 = vmul.f32 %v2363, %v2042
        %v2411 = vmul.f32 %v2367, %v2043
        %v2412 = vmul.f32 %v2371, %v2044
        %v2413 = vmul.f32 %v2375, %v2045
        %v2414 = vmul.f32 %v2379, %v2046
        %v2415 = vmul.f32 %v2383, %v2047
        %v2416 = vmul.f32 %v2387, %v2048
        %v2417 = vmul.f32 %v2391, %v2049
        %v2418 = vmul.f32 %v2395, %v2050
        %v2419 = vmul.f32 %v2399, %v2051
        %v2420 = vmul.f32 %v2403, %v2052
        %2437 = vrot.lane.b32.xlu0 %v2405, 96
        %v2438 = vpop.permute.xlu0 %2437
        %2439 = vrot.lane.b32.xlu0 %v2406, 96
        %v2440 = vpop.permute.xlu0 %2439
        %2441 = vrot.lane.b32.xlu0 %v2407, 96
        %v2442 = vpop.permute.xlu0 %2441
        %2443 = vrot.lane.b32.xlu0 %v2408, 96
        %v2444 = vpop.permute.xlu0 %2443
        %2445 = vrot.lane.b32.xlu0 %v2409, 96
        %v2446 = vpop.permute.xlu0 %2445
        %2447 = vrot.lane.b32.xlu0 %v2410, 96
        %v2448 = vpop.permute.xlu0 %2447
        %2449 = vrot.lane.b32.xlu0 %v2411, 96
        %v2450 = vpop.permute.xlu0 %2449
        %2451 = vrot.lane.b32.xlu0 %v2412, 96
        %v2452 = vpop.permute.xlu0 %2451
        %2453 = vrot.lane.b32.xlu0 %v2413, 96
        %v2454 = vpop.permute.xlu0 %2453
        %2455 = vrot.lane.b32.xlu0 %v2414, 96
        %v2456 = vpop.permute.xlu0 %2455
        %2457 = vrot.lane.b32.xlu0 %v2415, 96
        %v2458 = vpop.permute.xlu0 %2457
        %2459 = vrot.lane.b32.xlu0 %v2416, 96
        %v2460 = vpop.permute.xlu0 %2459
        %2461 = vrot.lane.b32.xlu0 %v2417, 96
        %v2462 = vpop.permute.xlu0 %2461
        %2463 = vrot.lane.b32.xlu0 %v2418, 96
        %v2464 = vpop.permute.xlu0 %2463
        %2465 = vrot.lane.b32.xlu0 %v2419, 96
        %v2466 = vpop.permute.xlu0 %2465
        %2467 = vrot.lane.b32.xlu0 %v2420, 96
        %v2468 = vpop.permute.xlu0 %2467
        %v2485 = vadd.f32 %v2325, %v2438
        %v2486 = vadd.f32 %v2326, %v2440
        %v2487 = vadd.f32 %v2327, %v2442
        %v2488 = vadd.f32 %v2328, %v2444
        %v2489 = vadd.f32 %v2329, %v2446
        %v2490 = vadd.f32 %v2330, %v2448
        %v2491 = vadd.f32 %v2331, %v2450
        %v2492 = vadd.f32 %v2332, %v2452
        %v2493 = vadd.f32 %v2333, %v2454
        %v2494 = vadd.f32 %v2334, %v2456
        %v2495 = vadd.f32 %v2335, %v2458
        %v2496 = vadd.f32 %v2336, %v2460
        %v2497 = vadd.f32 %v2337, %v2462
        %v2498 = vadd.f32 %v2338, %v2464
        %v2499 = vadd.f32 %v2339, %v2466
        %v2500 = vadd.f32 %v2340, %v2468
        %s2501 = sld [smem:[#allocation6]]
        %v2502 = vstv %s2501
        %v2503 = vadd.f32 %v2502, 0.0
        %s2504 = sld [smem:[#allocation7]]
        %v2505 = vstv %s2504
        %v2506 = vmul.f32 %v2505, %v2485
        %v2507 = vmul.f32 %v2505, %v2486
        %v2508 = vmul.f32 %v2505, %v2487
        %v2509 = vmul.f32 %v2505, %v2488
        %v2510 = vmul.f32 %v2505, %v2489
        %v2511 = vmul.f32 %v2505, %v2490
        %v2512 = vmul.f32 %v2505, %v2491
        %v2513 = vmul.f32 %v2505, %v2492
        %v2514 = vmul.f32 %v2505, %v2493
        %v2515 = vmul.f32 %v2505, %v2494
        %v2516 = vmul.f32 %v2505, %v2495
        %v2517 = vmul.f32 %v2505, %v2496
        %v2518 = vmul.f32 %v2505, %v2497
        %v2519 = vmul.f32 %v2505, %v2498
        %v2520 = vmul.f32 %v2505, %v2499
        %v2521 = vmul.f32 %v2505, %v2500
        %v2522 = vadd.f32 %v2503, %v2506
        %v2523 = vadd.f32 %v2503, %v2507
        %v2524 = vadd.f32 %v2503, %v2508
        %v2525 = vadd.f32 %v2503, %v2509
        %v2526 = vadd.f32 %v2503, %v2510
        %v2527 = vadd.f32 %v2503, %v2511
        %v2528 = vadd.f32 %v2503, %v2512
        %v2529 = vadd.f32 %v2503, %v2513
        %v2530 = vadd.f32 %v2503, %v2514
        %v2531 = vadd.f32 %v2503, %v2515
        %v2532 = vadd.f32 %v2503, %v2516
        %v2533 = vadd.f32 %v2503, %v2517
        %v2534 = vadd.f32 %v2503, %v2518
        %v2535 = vadd.f32 %v2503, %v2519
        %v2536 = vadd.f32 %v2503, %v2520
        %v2537 = vadd.f32 %v2503, %v2521
        %s2538 = sld [smem:[#allocation7 + $0x1]]
        %v2539 = vstv %s2538
        %v2540 = vmul.f32 %v2539, %v2485
        %v2541 = vmul.f32 %v2539, %v2486
        %v2542 = vmul.f32 %v2539, %v2487
        %v2543 = vmul.f32 %v2539, %v2488
        %v2544 = vmul.f32 %v2539, %v2489
        %v2545 = vmul.f32 %v2539, %v2490
        %v2546 = vmul.f32 %v2539, %v2491
        %v2547 = vmul.f32 %v2539, %v2492
        %v2548 = vmul.f32 %v2539, %v2493
        %v2549 = vmul.f32 %v2539, %v2494
        %v2550 = vmul.f32 %v2539, %v2495
        %v2551 = vmul.f32 %v2539, %v2496
        %v2552 = vmul.f32 %v2539, %v2497
        %v2553 = vmul.f32 %v2539, %v2498
        %v2554 = vmul.f32 %v2539, %v2499
        %v2555 = vmul.f32 %v2539, %v2500
        %2572 = vrot.lane.b32.xlu0 %v2540, 120
        %v2573 = vpop.permute.xlu0 %2572
        %2574 = vrot.lane.b32.xlu0 %v2541, 120
        %v2575 = vpop.permute.xlu0 %2574
        %2576 = vrot.lane.b32.xlu0 %v2542, 120
        %v2577 = vpop.permute.xlu0 %2576
        %2578 = vrot.lane.b32.xlu0 %v2543, 120
        %v2579 = vpop.permute.xlu0 %2578
        %2580 = vrot.lane.b32.xlu0 %v2544, 120
        %v2581 = vpop.permute.xlu0 %2580
        %2582 = vrot.lane.b32.xlu0 %v2545, 120
        %v2583 = vpop.permute.xlu0 %2582
        %2584 = vrot.lane.b32.xlu0 %v2546, 120
        %v2585 = vpop.permute.xlu0 %2584
        %2586 = vrot.lane.b32.xlu0 %v2547, 120
        %v2587 = vpop.permute.xlu0 %2586
        %2588 = vrot.lane.b32.xlu0 %v2548, 120
        %v2589 = vpop.permute.xlu0 %2588
        %2590 = vrot.lane.b32.xlu0 %v2549, 120
        %v2591 = vpop.permute.xlu0 %2590
        %2592 = vrot.lane.b32.xlu0 %v2550, 120
        %v2593 = vpop.permute.xlu0 %2592
        %2594 = vrot.lane.b32.xlu0 %v2551, 120
        %v2595 = vpop.permute.xlu0 %2594
        %2596 = vrot.lane.b32.xlu0 %v2552, 120
        %v2597 = vpop.permute.xlu0 %2596
        %2598 = vrot.lane.b32.xlu0 %v2553, 120
        %v2599 = vpop.permute.xlu0 %2598
        %2600 = vrot.lane.b32.xlu0 %v2554, 120
        %v2601 = vpop.permute.xlu0 %2600
        %2602 = vrot.lane.b32.xlu0 %v2555, 120
        %v2603 = vpop.permute.xlu0 %2602
        %v2620 = vadd.f32 %v2522, %v2573
        %v2621 = vadd.f32 %v2523, %v2575
        %v2622 = vadd.f32 %v2524, %v2577
        %v2623 = vadd.f32 %v2525, %v2579
        %v2624 = vadd.f32 %v2526, %v2581
        %v2625 = vadd.f32 %v2527, %v2583
        %v2626 = vadd.f32 %v2528, %v2585
        %v2627 = vadd.f32 %v2529, %v2587
        %v2628 = vadd.f32 %v2530, %v2589
        %v2629 = vadd.f32 %v2531, %v2591
        %v2630 = vadd.f32 %v2532, %v2593
        %v2631 = vadd.f32 %v2533, %v2595
        %v2632 = vadd.f32 %v2534, %v2597
        %v2633 = vadd.f32 %v2535, %v2599
        %v2634 = vadd.f32 %v2536, %v2601
        %v2635 = vadd.f32 %v2537, %v2603
        %vm2636 = vcmask 64512
        %2637 = vst.msk [vmem:[%s403] sm:$0xff] %vm2636, %v2620
        %2638 = vst.msk [vmem:[%s403 + $0x8] sm:$0xff] %vm2636, %v2621
        %2639 = vst.msk [vmem:[%s403 + $0x10] sm:$0xff] %vm2636, %v2622
        %2640 = vst.msk [vmem:[%s403 + $0x18] sm:$0xff] %vm2636, %v2623
        %2641 = vst.msk [vmem:[%s403 + $0x20] sm:$0xff] %vm2636, %v2624
        %2642 = vst.msk [vmem:[%s403 + $0x28] sm:$0xff] %vm2636, %v2625
        %2643 = vst.msk [vmem:[%s403 + $0x30] sm:$0xff] %vm2636, %v2626
        %2644 = vst.msk [vmem:[%s403 + $0x38] sm:$0xff] %vm2636, %v2627
        %2645 = vst.msk [vmem:[%s403 + $0x40] sm:$0xff] %vm2636, %v2628
        %2646 = vst.msk [vmem:[%s403 + $0x48] sm:$0xff] %vm2636, %v2629
        %2647 = vst.msk [vmem:[%s403 + $0x50] sm:$0xff] %vm2636, %v2630
        %2648 = vst.msk [vmem:[%s403 + $0x58] sm:$0xff] %vm2636, %v2631
        %2649 = vst.msk [vmem:[%s403 + $0x60] sm:$0xff] %vm2636, %v2632
        %2650 = vst.msk [vmem:[%s403 + $0x68] sm:$0xff] %vm2636, %v2633
        %2651 = vst.msk [vmem:[%s403 + $0x70] sm:$0xff] %vm2636, %v2634
        %2652 = vst.msk [vmem:[%s403 + $0x78] sm:$0xff] %vm2636, %v2635
        %s2653 = smul.u32 16, %s26
        %p2654 = scmp.lt.s32.totalorder %s2653, 31
        %s2655 = scalar_select %p2654, %s2653, 31
        %s2656 = smul.addr %s2655, 8
        %s2657 = scalar_lea.vmem %s8, %s2656
        // Predicated region
        $region77: #{tpu_custom_call.1} parent=51 // pred_check
          %p2658 = pneg %p239
        $region78: #{tpu_custom_call.1} parent=51 // pred_check_branch
          %2660 = sbr.rel (%p2658) target = $region80
        $region79: #{tpu_custom_call.1} parent=51 // pred_region
          %s2661 = smul.u32 16, %s26
        $region80: #{tpu_custom_call.1} parent=51 // pred_fallthru
          _
      $region52: #{tpu_custom_call.1} parent=5 // pred_fallthru
        _
      %p2662 = scmp.le.s32.totalorder 2, %s16
      // Predicated region
      $region81: #{tpu_custom_call.1} parent=5 // pred_check
        %p2663 = pneg %p2662
      $region82: #{tpu_custom_call.1} parent=5 // pred_check_branch
        %2665 = sbr.rel (%p2663) target = $region84
      $region83: #{tpu_custom_call.1} parent=5 // pred_region
        %s2666 = ssub.s32 %s16, 2
        // Predicated region
        $region85: #{tpu_custom_call.1} parent=83 // pred_check
          %p2667 = pneg %p245
        $region86: #{tpu_custom_call.1} parent=83 // pred_check_branch
          %2669 = sbr.rel (%p2667) target = $region88
        $region87: #{tpu_custom_call.1} parent=83 // pred_region
          %s2670 = smul.u32 16, %s28
          %p2671 = scmp.lt.s32.totalorder %s2670, 31
          %s2672 = scalar_select %p2671, %s2670, 31
          %s2673 = smul.addr %s2672, 8
          %s2674 = scalar_lea.vmem %s8, %s2673
        $region88: #{tpu_custom_call.1} parent=83 // pred_fallthru
          _
      $region84: #{tpu_custom_call.1} parent=5 // pred_fallthru
        _
    $region6: #{tpu_custom_call.1} parent=1 // loop_footer
      %s20 = sadd.s32 1, %s16
    $region7: #{tpu_custom_call.1} parent=1 // loop_footer_branch
      %15 = sbr.rel target = $region3
    $region8: #{tpu_custom_call.1} parent=1 // loop_exit
      _
    %2675 = vsyncpa [#allocation8], 1
    %s2676 = scalar_lea.sflag [#allocation8], 1
    %2677 = vsyncpa %s2676, 1

</llo_original>
